<compile_context>
chip_gen: v6e
topology: v6e:2x2x1
jax: 0.10.0
libtpu: 0.0.40
codegen_flags: <defaults>
</compile_context>

<pallas_src>
import jax
import jax.numpy as jnp
from jax.experimental import pallas as pl
from jax.experimental.pallas import tpu as pltpu


def _round_up(x, m):
    return ((x + m - 1) // m) * m


# ----------------------------------------------------------------------------
# Pallas kernel: one grid step == TB batch elements.
# ----------------------------------------------------------------------------
def read_unit_kernel(q_ref,     # (TB, D)     folded per-batch query (fp32)
                     know_ref,  # (TB, D, S)  knowledge, native layout & dtype
                     out_ref):  # (TB, D)     read vector
    know = know_ref[...]                                     # (TB, D, S)
    q = q_ref[...].astype(know.dtype)[:, None, :]            # (TB, 1, D)

    # logits[b,0,s] = sum_d q[b,0,d] * know[b,d,s]   (QK^T-style MXU matvec).
    # The per-batch constant c0 cancels in the softmax and is omitted.
    logits = jnp.einsum('bqd,bds->bqs', q, know,
                        preferred_element_type=jnp.float32)  # (TB, 1, S) fp32

    # Softmax over the S knowledge objects (lane axis), fp32.
    m = jnp.max(logits, axis=-1, keepdims=True)              # (TB, 1, 1)
    e = jnp.exp(logits - m)                                  # (TB, 1, S)
    w = e / jnp.sum(e, axis=-1, keepdims=True)               # (TB, 1, S)

    # read[b,d] = sum_s w[b,s] * know[b,d,s]  -- PV-style MXU contraction over
    # the lane axis of both operands (keeps the per-row XLU lane-reduce off
    # the critical path; the MXU is otherwise idle after the logits matvec).
    read = jnp.einsum('bqs,bds->bqd', w.astype(know.dtype), know,
                      preferred_element_type=jnp.float32)    # (TB, 1, D)
    out_ref[...] = read[:, 0, :].astype(out_ref.dtype)


# ----------------------------------------------------------------------------
# Padding-aware VMEM accounting (sublane/lane rounding + double buffering).
# ----------------------------------------------------------------------------
def _block_footprint_bytes(tb, D, S, know_itemsize):
    sub = 8 * max(1, 4 // know_itemsize)                 # fp32->8, bf16->16, i8->32
    know_blk = tb * _round_up(D, sub) * _round_up(S, 128) * know_itemsize
    q_blk = _round_up(tb, 8) * _round_up(D, 128) * 4     # q is fp32
    out_blk = _round_up(tb, 8) * _round_up(D, 128) * know_itemsize
    return 2 * (know_blk + q_blk + out_blk)              # double-buffered in/out


def _vmem_budget():
    phys = 64 << 20                                      # conservative (v7x per-core)
    try:
        info = pltpu.get_tpu_info()
        phys = int(getattr(info, "vmem_capacity_bytes", phys))
    except Exception:
        pass
    # ~3/4 of physical: ~48 MiB on v7x (64 MiB), ~96 MiB on v5e/v6e (128 MiB).
    return int(min(phys * 3 // 4, 96 << 20))


def _pick_tb(B, D, S, know_itemsize, vmem_budget):
    valid = [t for t in range(1, B + 1) if B % t == 0 and (t == B or t % 8 == 0)]
    fitting = [t for t in valid
               if _block_footprint_bytes(t, D, S, know_itemsize) <= vmem_budget]
    if not fitting:
        # Smallest legal tile; may still exceed the budget (compile-time failure
        # rather than silent wrong results).
        fitting = [min(valid)]

    def pick(min_steps, want_even):
        c = [t for t in fitting
             if B // t >= min_steps and (not want_even or (B // t) % 2 == 0)]
        return max(c) if c else None

    # Prefer >=4 grid steps (>=2 per TensorCore on v7x megacore) with an even
    # step count, then >=2 steps (pipelining), then the largest fitting tile.
    return pick(4, True) or pick(4, False) or pick(2, False) or max(fitting)


# ----------------------------------------------------------------------------
# Wrapper: hoisted/folded precompute (batched XLA matmuls) + pallas_call.
# ----------------------------------------------------------------------------
def read_unit_pallas(memory, know, control, params, *, tb=None):
    """memory, control: (T, B, D); know: (B, D, S) in its native dtype
    (fp32 or bf16).  Returns read: (B, D) in know.dtype."""
    Wm, bm, Wc, bc, Wa, ba = params
    del bc, ba  # only contribute a per-batch constant that cancels in softmax
    B, D, S = know.shape
    f32 = jnp.float32
    # HIGHEST kept so the fp32 reference check at demo size is meaningful; at
    # production sizes DEFAULT (or bf16 inputs) is fine for these tiny matmuls.
    hp = jax.lax.Precision.HIGHEST

    mem_last = memory[-1].astype(f32)                        # (B, D)
    ctrl_last = control[-1].astype(f32)                      # (B, D)

    # ---- hoisted / folded precompute (exact) --------------------------------
    mem_p = jnp.dot(mem_last, Wm.T, precision=hp) + bm       # (B, D)  mem Linear
    v = ctrl_last * Wa.reshape(1, D)                         # (B, D)  ctrl ⊙ attn weight
    u = jnp.dot(v, Wc, precision=hp)                         # (B, 2D) fold of concat Linear
    q = mem_p * u[:, :D] + u[:, D:]                          # (B, D)  per-batch query

    vmem_budget = _vmem_budget()
    know_itemsize = know.dtype.itemsize
    TB = tb if tb is not None else _pick_tb(B, D, S, know_itemsize, vmem_budget)
    assert B % TB == 0 and (TB == B or TB % 8 == 0), (B, TB)
    fp_bytes = _block_footprint_bytes(TB, D, S, know_itemsize)
    vmem_limit = int(max(vmem_budget, fp_bytes + (2 << 20)))

    out = pl.pallas_call(
        read_unit_kernel,
        out_shape=jax.ShapeDtypeStruct((B, D), know.dtype),
        grid_spec=pltpu.PrefetchScalarGridSpec(
            num_scalar_prefetch=0,
            grid=(B // TB,),
            in_specs=[
                pl.BlockSpec((TB, D), lambda i: (i, 0)),        # q (fp32, padding-free)
                pl.BlockSpec((TB, D, S), lambda i: (i, 0, 0)),  # know, native dtype/layout
            ],
            out_specs=pl.BlockSpec((TB, D), lambda i: (i, 0)),  # dense (TB, D) slab
        ),
        compiler_params=pltpu.CompilerParams(
            dimension_semantics=("parallel",),
            vmem_limit_bytes=vmem_limit,
        ),
    )(q, know)
    return out


# ----------------------------------------------------------------------------
# Pure-JAX reference (mirrors the PyTorch forward) for correctness checking.
# ----------------------------------------------------------------------------
def read_unit_ref(memory, know, control, params):
    Wm, bm, Wc, bc, Wa, ba = params
    hp = jax.lax.Precision.HIGHEST
    mem_last = memory[-1]                                        # (B, D)
    ctrl_last = control[-1]                                      # (B, D)
    mem = (jnp.dot(mem_last, Wm.T, precision=hp) + bm)[:, :, None]   # (B, D, 1)
    cat = jnp.concatenate([mem * know, know], axis=1)            # (B, 2D, S)
    cat = jnp.transpose(cat, (0, 2, 1))                          # (B, S, 2D)
    concat = jnp.einsum('bsk,dk->bsd', cat, Wc, precision=hp) + bc   # (B, S, D)
    attn = concat * ctrl_last[:, None, :]                        # (B, S, D)
    logits = (jnp.einsum('bsd,od->bso', attn, Wa, precision=hp) + ba)[..., 0]  # (B, S)
    w = jax.nn.softmax(logits, axis=1)[:, None, :]               # (B, 1, S)
    return jnp.sum(w * know, axis=2)                             # (B, D)


# ----------------------------------------------------------------------------
# Deterministic parameter init (xavier_uniform_ for weights, zero biases).
# ----------------------------------------------------------------------------
def xavier_uniform(key, out_dim, in_dim):
    bound = jnp.sqrt(6.0 / (in_dim + out_dim))
    return jax.random.uniform(key, (out_dim, in_dim), jnp.float32,
                              minval=-bound, maxval=bound)


def init_params(key, dim):
    k1, k2, k3 = jax.random.split(key, 3)
    Wm = xavier_uniform(k1, dim, dim)          # (D, D)
    bm = jnp.zeros((dim,), jnp.float32)
    Wc = xavier_uniform(k2, dim, 2 * dim)      # (D, 2D)
    bc = jnp.zeros((dim,), jnp.float32)
    Wa = xavier_uniform(k3, 1, dim)            # (1, D)
    ba = jnp.zeros((1,), jnp.float32)
    return (Wm, bm, Wc, bc, Wa, ba)


if __name__ == "__main__":
    key = jax.random.PRNGKey(0)
    # batch, hidden dim, knowledge objects, MAC steps (small demo shapes;
    # B=16 -> TB=8 -> 2 parallel grid steps).  In production pass `know` as
    # bfloat16; the kernel keeps fp32 accumulation.
    B, D, S, T = 16, 32, 16, 3

    kp, km, kk, kc = jax.random.split(key, 4)
    params = init_params(kp, D)
    memory = jax.random.normal(km, (T, B, D), jnp.float32)    # memory states
    know = jax.random.normal(kk, (B, D, S), jnp.float32)      # knowledge (B, D, S)
    control = jax.random.normal(kc, (T, B, D), jnp.float32)   # control states

    run = jax.jit(lambda m, k, c: read_unit_pallas(m, k, c, params))
    read = jax.block_until_ready(run(memory, know, control))

    ref = read_unit_ref(memory, know, control, params)
    assert read.shape == (B, D)
    max_err = jnp.max(jnp.abs(read - ref))
    # Tolerance accounts for fp32 re-association from the algebraic fold
    # (mathematically exact, only summation order differs).
    assert jnp.allclose(read, ref, atol=1e-4, rtol=1e-4), f"max abs err {max_err}"

    print("KERNEL_OK")
</pallas_src>

<mosaic_0001>
module attributes {stable_mosaic.version = 11 : i64} {
  func.func @read_unit_kernel(%arg0: i32, %arg1: memref<8x32xf32, #tpu.memory_space<vmem>>, %arg2: memref<8x32x16xf32, #tpu.memory_space<vmem>>, %arg3: memref<8x32xf32, #tpu.memory_space<vmem>>) attributes {dimension_semantics = [#tpu.dimension_semantics<parallel>], iteration_bounds = array<i64: 2>, scalar_prefetch = 0 : i64, scratch_operands = 0 : i64, tpu.core_type = #tpu.core_type<tc>, window_params = [{transform_indices = @transform_0, window_bounds = array<i64: 8, 32>}, {transform_indices = @transform_1, window_bounds = array<i64: 8, 32, 16>}, {transform_indices = @transform_2, window_bounds = array<i64: 8, 32>}]} {
    %c0 = arith.constant 0 : index
    %c0_0 = arith.constant 0 : index
    %c0_1 = arith.constant 0 : index
    %0 = vector.load %arg2[%c0, %c0_0, %c0_1] : memref<8x32x16xf32, #tpu.memory_space<vmem>>, vector<8x32x16xf32>
    %c0_2 = arith.constant 0 : index
    %c0_3 = arith.constant 0 : index
    %1 = vector.load %arg1[%c0_2, %c0_3] : memref<8x32xf32, #tpu.memory_space<vmem>>, vector<8x32xf32>
    %2 = vector.shape_cast %1 : vector<8x32xf32> to vector<8x1x32xf32>
    "tpu.trace_start"() <{level = 10 : i32, message = "bqd,bds->bqs"}> : () -> ()
    %cst = arith.constant dense<0.000000e+00> : vector<8x1x16xf32>
    %3 = tpu.matmul %2, %0, %cst {dimension_numbers = #tpu.dot_dimension_numbers<[2], [1], [1], [2], [0, 0, 0, 1, 1, 2], [0], [0]>} : vector<8x1x32xf32>, vector<8x32x16xf32>, vector<8x1x16xf32> -> vector<8x1x16xf32>
    "tpu.trace_stop"() : () -> ()
    %cst_4 = arith.constant dense<0xFF800000> : vector<8x1xf32>
    %4 = vector.multi_reduction <maximumf>, %3, %cst_4 [2] : vector<8x1x16xf32> to vector<8x1xf32>
    %5 = vector.shape_cast %4 : vector<8x1xf32> to vector<8x1x1xf32>
    %6 = vector.broadcast %5 : vector<8x1x1xf32> to vector<8x1x16xf32>
    %7 = arith.subf %3, %6 : vector<8x1x16xf32>
    %8 = math.exp %7 : vector<8x1x16xf32>
    %cst_5 = arith.constant dense<0.000000e+00> : vector<8x1xf32>
    %9 = vector.multi_reduction <add>, %8, %cst_5 [2] : vector<8x1x16xf32> to vector<8x1xf32>
    %10 = vector.shape_cast %9 : vector<8x1xf32> to vector<8x1x1xf32>
    %11 = vector.broadcast %10 : vector<8x1x1xf32> to vector<8x1x16xf32>
    %12 = arith.divf %8, %11 : vector<8x1x16xf32>
    "tpu.trace_start"() <{level = 10 : i32, message = "bqs,bds->bqd"}> : () -> ()
    %cst_6 = arith.constant dense<0.000000e+00> : vector<8x1x32xf32>
    %13 = tpu.matmul %12, %0, %cst_6 {dimension_numbers = #tpu.dot_dimension_numbers<[2], [2], [1], [1], [0, 0, 0, 1, 1, 1], [0], [0]>} : vector<8x1x16xf32>, vector<8x32x16xf32>, vector<8x1x32xf32> -> vector<8x1x32xf32>
    "tpu.trace_stop"() : () -> ()
    %14 = vector.shape_cast %13 : vector<8x1x32xf32> to vector<8x32xf32>
    %c0_7 = arith.constant 0 : index
    %c0_8 = arith.constant 0 : index
    %15 = vector.load %arg3[%c0_7, %c0_8] : memref<8x32xf32, #tpu.memory_space<vmem>>, vector<8x32xf32>
    tpu.vector_store %arg3[%c0_7, %c0_8], %14 {strides = array<i32>} : memref<8x32xf32, #tpu.memory_space<vmem>>, vector<8x32xf32>,
    return
  }
  func.func @transform_0(%arg0: i32) -> (i32, i32) {
    %c0_i32 = arith.constant 0 : i32
    %c0_i32_0 = arith.constant 0 : i32
    return %arg0, %c0_i32 : i32, i32
  }
  func.func @transform_1(%arg0: i32) -> (i32, i32, i32) {
    %c0_i32 = arith.constant 0 : i32
    %c0_i32_0 = arith.constant 0 : i32
    %c0_i32_1 = arith.constant 0 : i32
    return %arg0, %c0_i32, %c0_i32_0 : i32, i32, i32
  }
  func.func @transform_2(%arg0: i32) -> (i32, i32) {
    %c0_i32 = arith.constant 0 : i32
    %c0_i32_0 = arith.constant 0 : i32
    return %arg0, %c0_i32 : i32, i32
  }
}

</mosaic_0001>

<llo_original>
// kernel: _lambda_.1
$region0: #{_lambda_.1}
  #allocation0 [shape = 'u32[]', space=smem, size = 0x4, offset = 0x4, fixed_abs, tag = 'smem constant byte address 0x4 - core index']
  #allocation1 [shape = 'u32[144,128]{1,0:T(1,128)}', space=vmem, size = 0x12000, scoped, tag = 'internal scratch']
  %s0 = inlined_call_operand.vmem [shape: f32[16,32], index: 0, kind: input, shape index: {}]
  %s1 = inlined_call_operand.vmem [shape: f32[16,32,16], index: 1, kind: input, shape index: {}]
  %s2 = inlined_call_operand.hbm [shape: f32[16,32], index: 2, kind: output, shape index: {}]
  %s3 = sld [smem:[#allocation0]]
  $region41: #{_lambda_.1} parent=0
    _
  %s5 = ssub.s32 1, %s3
  %s6 = scalar_select 0, %s5, %s3
  $region1: #{_lambda_.1} parent=0
    #allocation2 [shape = 'u8[8192]{0}', space=vmem, size = 0x2000, scoped, tag = 'output window, operand 0']
    #allocation3 [shape = 's32[2]{0}', space=sflag, size = 0x8, scoped, tag = 'scoped memory for _lambda_.1']
    %7 = vsyncpa [#allocation3], 0
    %s8 = scalar_lea.sflag [#allocation3], 1
    %9 = vsyncpa %s8, 0
    loop: start=0, step=1, limit=4
    $region2: #{_lambda_.1} parent=1 // loop_pre_header
      _
    $region3: #{_lambda_.1} parent=1 // loop_header
      %s11 = sphi 0, %s15
      %p12 = scmp.ge.s32.totalorder %s11, 4
      %s21 = sphi 0, %s23
      %s24 = sphi 0, %s21
      %s25 = sphi 0, %s24
      %s41 = sphi 0, %s25
      %s47 = sphi 0, %s49
      %s50 = sphi 0, %s47
      %s51 = sphi 0, %s50
      %s67 = sphi 0, %s51
      %s73 = sphi 0, %s75
      %s76 = sphi 0, %s73
      %s77 = sphi 0, %s76
      %s93 = sphi 0, %s77
    $region4: #{_lambda_.1} parent=1 // loop_header_branch
      %14 = sbr.rel (%p12) target = $region8
    $region5: #{_lambda_.1} parent=1 // loop_body
      %s16 = ssub.s32 %s11, 1
      %s17 = ssub.s32 %s11, 2
      %s18 = sadd.s32 %s11, 1
      %s19 = ssub.s32 %s11, %s18
      %p20 = scmp.eq.s32.totalorder %s19, 0
      %s22 = sadd.s32 %s21, 1
      %s23 = scalar_select %p20, %s21, %s22
      %p26 = pneg %p20
      %p27 = scmp.eq.s32.totalorder %s11, 1
      %p28 = por %p26, %p27
      %p29 = scmp.ne.s32.totalorder %s21, %s24
      %p30 = scmp.eq.s32.totalorder %s11, 0
      %p31 = por %p29, %p30
      %p32 = scmp.ne.s32.totalorder %s21, %s24
      %p33 = scmp.eq.s32.totalorder %s16, 1
      %p34 = por %p32, %p33
      %p35 = scmp.ne.s32.totalorder %s24, %s25
      %p36 = scmp.eq.s32.totalorder %s16, 0
      %p37 = por %p35, %p36
      %p38 = scmp.ne.s32.totalorder %s24, %s25
      %p39 = scmp.eq.s32.totalorder %s17, 1
      %p40 = por %p38, %p39
      %p42 = scmp.ne.s32.totalorder %s25, %s41
      %p43 = scmp.eq.s32.totalorder %s17, 0
      %p44 = por %p42, %p43
      %s45 = ssub.s32 %s11, %s18
      %p46 = scmp.eq.s32.totalorder %s45, 0
      %s48 = sadd.s32 %s47, 1
      %s49 = scalar_select %p46, %s47, %s48
      %p52 = pneg %p46
      %p53 = scmp.eq.s32.totalorder %s11, 1
      %p54 = por %p52, %p53
      %p55 = scmp.ne.s32.totalorder %s47, %s50
      %p56 = scmp.eq.s32.totalorder %s11, 0
      %p57 = por %p55, %p56
      %p58 = scmp.ne.s32.totalorder %s47, %s50
      %p59 = scmp.eq.s32.totalorder %s16, 1
      %p60 = por %p58, %p59
      %p61 = scmp.ne.s32.totalorder %s50, %s51
      %p62 = scmp.eq.s32.totalorder %s16, 0
      %p63 = por %p61, %p62
      %p64 = scmp.ne.s32.totalorder %s50, %s51
      %p65 = scmp.eq.s32.totalorder %s17, 1
      %p66 = por %p64, %p65
      %p68 = scmp.ne.s32.totalorder %s51, %s67
      %p69 = scmp.eq.s32.totalorder %s17, 0
      %p70 = por %p68, %p69
      %s71 = ssub.s32 %s11, %s18
      %p72 = scmp.eq.s32.totalorder %s71, 0
      %s74 = sadd.s32 %s73, 1
      %s75 = scalar_select %p72, %s73, %s74
      %p78 = pneg %p72
      %p79 = scmp.eq.s32.totalorder %s11, 1
      %p80 = por %p78, %p79
      %p81 = scmp.ne.s32.totalorder %s73, %s76
      %p82 = scmp.eq.s32.totalorder %s11, 0
      %p83 = por %p81, %p82
      %p84 = scmp.ne.s32.totalorder %s73, %s76
      %p85 = scmp.eq.s32.totalorder %s16, 1
      %p86 = por %p84, %p85
      %p87 = scmp.ne.s32.totalorder %s76, %s77
      %p88 = scmp.eq.s32.totalorder %s16, 0
      %p89 = por %p87, %p88
      %p90 = scmp.ne.s32.totalorder %s76, %s77
      %p91 = scmp.eq.s32.totalorder %s17, 1
      %p92 = por %p90, %p91
      %p94 = scmp.ne.s32.totalorder %s77, %s93
      %p95 = scmp.eq.s32.totalorder %s17, 0
      %p96 = por %p94, %p95
      %p97 = scmp.le.s32.totalorder 1, %s11
      %p98 = scmp.lt.s32.totalorder %s11, 3
      %p99 = pnand %p97, %p98
      %p100 = pneg %p99
      // Predicated region
      $region9: #{_lambda_.1} parent=5 // pred_check
        _
      $region10: #{_lambda_.1} parent=5 // pred_check_branch
        %102 = sbr.rel (%p99) target = $region12
      $region11: #{_lambda_.1} parent=5 // pred_region
        %s103 = ssub.s32 %s11, 1
      $region12: #{_lambda_.1} parent=5 // pred_fallthru
        _
      %p104 = scmp.lt.s32.totalorder %s11, 2
      // Predicated region
      $region13: #{_lambda_.1} parent=5 // pred_check
        %p105 = pneg %p104
      $region14: #{_lambda_.1} parent=5 // pred_check_branch
        %107 = sbr.rel (%p105) target = $region16
      $region15: #{_lambda_.1} parent=5 // pred_region
        // Predicated region
        $region17: #{_lambda_.1} parent=15 // pred_check
          %p108 = pneg %p31
        $region18: #{_lambda_.1} parent=15 // pred_check_branch
          %110 = sbr.rel (%p108) target = $region20
        $region19: #{_lambda_.1} parent=15 // pred_region
          %p111 = scmp.lt.s32.totalorder %s11, 1
          %s112 = scalar_select %p111, %s11, 1
          %s113 = smul.addr %s112, 8
          %s114 = scalar_lea.vmem %s0, %s113
        $region20: #{_lambda_.1} parent=15 // pred_fallthru
          _
        // Predicated region
        $region21: #{_lambda_.1} parent=15 // pred_check
          %p115 = pneg %p57
        $region22: #{_lambda_.1} parent=15 // pred_check_branch
          %117 = sbr.rel (%p115) target = $region24
        $region23: #{_lambda_.1} parent=15 // pred_region
          %s118 = smul.u32 8, %s11
          %p119 = scmp.lt.s32.totalorder %s118, 15
          %s120 = scalar_select %p119, %s118, 15
          %s121 = smul.addr %s120, 4
          %s122 = smul.addr %s121, 8
          %s123 = scalar_lea.vmem %s1, %s122
          %s124 = smul.u32 8, %s11
        $region24: #{_lambda_.1} parent=15 // pred_fallthru
          _
      $region16: #{_lambda_.1} parent=5 // pred_fallthru
        _
      %p125 = scmp.le.s32.totalorder 1, %s11
      %p126 = scmp.lt.s32.totalorder %s11, 3
      %p127 = pnand %p125, %p126
      %p128 = pneg %p127
      // Predicated region
      $region25: #{_lambda_.1} parent=5 // pred_check
        _
      $region26: #{_lambda_.1} parent=5 // pred_check_branch
        %130 = sbr.rel (%p127) target = $region28
      $region27: #{_lambda_.1} parent=5 // pred_region
        %s131 = ssub.s32 %s11, 1
        %p132 = scmp.lt.s32.totalorder %s16, 1
        %s133 = scalar_select %p132, %s16, 1
        %s134 = smul.addr %s133, 8
        %s135 = scalar_lea.vmem %s0, %s134
        %p136 = pneg %p37
        %p137 = pneg %p34
        %s138 = smul.u32 8, %s16
        %p139 = scmp.lt.s32.totalorder %s138, 15
        %s140 = scalar_select %p139, %s138, 15
        %s141 = smul.addr %s140, 4
        %s142 = smul.addr %s141, 8
        %s143 = scalar_lea.vmem %s1, %s142
        %p144 = pneg %p63
        %p145 = pneg %p60
        %p146 = pneg %p89
        %p147 = pneg %p86
        %s148 = sand.u32 %s76, 1
        %s149 = scalar_lea.sflag [#allocation3], %s148
        %s150 = sand.u32 %s76, 1
        %s151 = smul.addr %s150, 8
        %s152 = scalar_lea.vmem [#allocation2], %s151
        %p153 = scmp.lt.s32.totalorder %s16, 1
        %s154 = scalar_select %p153, %s16, 1
        %s155 = smul.addr %s154, 8
        %s156 = scalar_lea.vmem %s0, %s155
        %s157 = smul.u32 8, %s16
        %p158 = scmp.lt.s32.totalorder %s157, 15
        %s159 = scalar_select %p158, %s157, 15
        %s160 = smul.addr %s159, 4
        %s161 = smul.addr %s160, 8
        %s162 = scalar_lea.vmem %s1, %s161
        %s163 = smul.u32 8, %s16
        %v164 = vld [vmem:[%s162] sm:$0xff]
        %v165 = vld [vmem:[%s162 + $0x8] sm:$0xff]
        %v166 = vld [vmem:[%s162 + $0x10] sm:$0xff]
        %v167 = vld [vmem:[%s162 + $0x18] sm:$0xff]
        %v168 = vld [vmem:[%s162 + $0x20] sm:$0xff]
        %v169 = vld [vmem:[%s162 + $0x28] sm:$0xff]
        %v170 = vld [vmem:[%s162 + $0x30] sm:$0xff]
        %v171 = vld [vmem:[%s162 + $0x38] sm:$0xff]
        %v172 = vld [vmem:[%s162 + $0x40] sm:$0xff]
        %v173 = vld [vmem:[%s162 + $0x48] sm:$0xff]
        %v174 = vld [vmem:[%s162 + $0x50] sm:$0xff]
        %v175 = vld [vmem:[%s162 + $0x58] sm:$0xff]
        %v176 = vld [vmem:[%s162 + $0x60] sm:$0xff]
        %v177 = vld [vmem:[%s162 + $0x68] sm:$0xff]
        %v178 = vld [vmem:[%s162 + $0x70] sm:$0xff]
        %v179 = vld [vmem:[%s162 + $0x78] sm:$0xff]
        %v180 = vld [vmem:[%s162 + $0x80] sm:$0xff]
        %v181 = vld [vmem:[%s162 + $0x88] sm:$0xff]
        %v182 = vld [vmem:[%s162 + $0x90] sm:$0xff]
        %v183 = vld [vmem:[%s162 + $0x98] sm:$0xff]
        %v184 = vld [vmem:[%s162 + $0xa0] sm:$0xff]
        %v185 = vld [vmem:[%s162 + $0xa8] sm:$0xff]
        %v186 = vld [vmem:[%s162 + $0xb0] sm:$0xff]
        %v187 = vld [vmem:[%s162 + $0xb8] sm:$0xff]
        %v188 = vld [vmem:[%s162 + $0xc0] sm:$0xff]
        %v189 = vld [vmem:[%s162 + $0xc8] sm:$0xff]
        %v190 = vld [vmem:[%s162 + $0xd0] sm:$0xff]
        %v191 = vld [vmem:[%s162 + $0xd8] sm:$0xff]
        %v192 = vld [vmem:[%s162 + $0xe0] sm:$0xff]
        %v193 = vld [vmem:[%s162 + $0xe8] sm:$0xff]
        %v194 = vld [vmem:[%s162 + $0xf0] sm:$0xff]
        %v195 = vld [vmem:[%s162 + $0xf8] sm:$0xff]
        %v196 = vld [vmem:[%s156] sm:$0xff]
        %v198 = vcombine.high %v196, %v196
        %v200 = vunpack.c.l.s4 1966171168
        %v201 = vunpack.c.0.s8 %v200
        %v202 = vlaneseq
        %v203 = vshrl.u32 %v202, 7
        %v204 = vsub.s32 %v201, %v203
        %v205 = vrot.slane %v196, %v204
        %v207 = vunpack.c.l.s4 1966171168
        %v208 = vunpack.c.0.s8 %v207
        %v209 = vlaneseq
        %v210 = vshrl.u32 %v209, 7
        %v211 = vsub.s32 %v208, %v210
        %v212 = vrot.slane %v198, %v211
        %v213 = vcombine.high %v205, %v205
        %v214 = vcombine.high %v212, %v212
        %v216 = vunpack.c.l.s4 1966171168
        %v217 = vunpack.c.0.s8 %v216
        %v218 = vlaneseq
        %v219 = vshrl.u32 %v218, 7
        %v220 = vsub.s32 %v217, %v219
        %v221 = vrot.slane %v205, %v220
        %v223 = vunpack.c.l.s4 1966171168
        %v224 = vunpack.c.0.s8 %v223
        %v225 = vlaneseq
        %v226 = vshrl.u32 %v225, 7
        %v227 = vsub.s32 %v224, %v226
        %v228 = vrot.slane %v212, %v227
        %v230 = vunpack.c.l.s4 1966171168
        %v231 = vunpack.c.0.s8 %v230
        %v232 = vlaneseq
        %v233 = vshrl.u32 %v232, 7
        %v234 = vsub.s32 %v231, %v233
        %v235 = vrot.slane %v213, %v234
        %v237 = vunpack.c.l.s4 1966171168
        %v238 = vunpack.c.0.s8 %v237
        %v239 = vlaneseq
        %v240 = vshrl.u32 %v239, 7
        %v241 = vsub.s32 %v238, %v240
        %v242 = vrot.slane %v214, %v241
        %v243 = vcombine.high %v221, %v221
        %v244 = vcombine.high %v228, %v228
        %v245 = vcombine.high %v235, %v235
        %v246 = vcombine.high %v242, %v242
        %vm247 = vcmask 261120
        %v248 = vsel %vm247, %v221, 0
        %250 = vmatprep.subr.mxu0 0.0
        %251 = vmatpush1.msra.mxu0 0.0
        %252 = vmatprep.subr.mxu0 0.0
        %253 = vmatpush1.msra.mxu0 0.0
        %254 = vmatprep.subr.mxu0 0.0
        %255 = vmatpush1.msra.mxu0 0.0
        %256 = vmatprep.subr.mxu0 0.0
        %257 = vmatpush1.msra.mxu0 0.0
        %258 = vmatprep.subr.mxu0 0.0
        %259 = vmatpush1.msra.mxu0 0.0
        %260 = vmatprep.subr.mxu0 0.0
        %261 = vmatpush1.msra.mxu0 0.0
        %262 = vmatprep.subr.mxu0 0.0
        %263 = vmatpush1.msra.mxu0 0.0
        %264 = vmatprep.subr.mxu0 0.0
        %265 = vmatpush1.msra.mxu0 0.0
        %266 = vmatprep.subr.mxu0 0.0
        %267 = vmatpush1.msra.mxu0 0.0
        %268 = vmatprep.subr.mxu0 0.0
        %269 = vmatpush1.msra.mxu0 0.0
        %270 = vmatprep.subr.mxu0 0.0
        %271 = vmatpush1.msra.mxu0 0.0
        %272 = vmatprep.subr.mxu0 0.0
        %273 = vmatpush1.msra.mxu0 0.0
        %274 = vmatprep.subr.mxu0 0.0
        %275 = vmatpush1.msra.mxu0 %v167
        %276 = vmatprep.subr.mxu0 0.0
        %277 = vmatpush1.msra.mxu0 %v166
        %278 = vmatprep.subr.mxu0 0.0
        %279 = vmatpush1.msra.mxu0 %v165
        %280 = vmatprep.subr.mxu0 0.0
        %281 = vmatpush1.msra.mxu0 %v164
        %282 = vmatprep.subr.mxu0 0.0
        %283 = vmatpush2.msra.mxu0 0.0
        %284 = vmatprep.subr.mxu0 0.0
        %285 = vmatpush2.msra.mxu0 0.0
        %286 = vmatprep.subr.mxu0 0.0
        %287 = vmatpush2.msra.mxu0 0.0
        %288 = vmatprep.subr.mxu0 0.0
        %289 = vmatpush2.msra.mxu0 0.0
        %290 = vmatprep.subr.mxu0 0.0
        %291 = vmatpush2.msra.mxu0 0.0
        %292 = vmatprep.subr.mxu0 0.0
        %293 = vmatpush2.msra.mxu0 0.0
        %294 = vmatprep.subr.mxu0 0.0
        %295 = vmatpush2.msra.mxu0 0.0
        %296 = vmatprep.subr.mxu0 0.0
        %297 = vmatpush2.msra.mxu0 0.0
        %298 = vmatprep.subr.mxu0 0.0
        %299 = vmatpush2.msra.mxu0 0.0
        %300 = vmatprep.subr.mxu0 0.0
        %301 = vmatpush2.msra.mxu0 0.0
        %302 = vmatprep.subr.mxu0 0.0
        %303 = vmatpush2.msra.mxu0 0.0
        %304 = vmatprep.subr.mxu0 0.0
        %305 = vmatpush2.msra.mxu0 0.0
        %306 = vmatprep.subr.mxu0 0.0
        %307 = vmatpush2.msra.mxu0 0.0
        %308 = vmatprep.subr.mxu0 0.0
        %309 = vmatpush2.msra.mxu0 0.0
        %310 = vmatprep.subr.mxu0 0.0
        %311 = vmatpush2.msra.mxu0 0.0
        %312 = vmatprep.subr.mxu0 0.0
        %313 = vmatpush2.msra.mxu0 0.0
        %314 = vmatprep.mubr.f32.mxu0 0.0
        %315 = vmatmul.mubr.f32.gmra.mxu0 %v248
        %v316 = vpop.f32.mrf.mxu0
        %v317 = vadd.f32 0.0, %v316
        %v318 = vpop.f32.mrf.mxu0
        %319 = vdwg.mxu0
        %v320 = vsel %vm247, %v235, 0
        %322 = vmatprep.subr.mxu0 0.0
        %323 = vmatpush1.msra.mxu0 0.0
        %324 = vmatprep.subr.mxu0 0.0
        %325 = vmatpush1.msra.mxu0 0.0
        %326 = vmatprep.subr.mxu0 0.0
        %327 = vmatpush1.msra.mxu0 0.0
        %328 = vmatprep.subr.mxu0 0.0
        %329 = vmatpush1.msra.mxu0 0.0
        %330 = vmatprep.subr.mxu0 0.0
        %331 = vmatpush1.msra.mxu0 0.0
        %332 = vmatprep.subr.mxu0 0.0
        %333 = vmatpush1.msra.mxu0 0.0
        %334 = vmatprep.subr.mxu0 0.0
        %335 = vmatpush1.msra.mxu0 0.0
        %336 = vmatprep.subr.mxu0 0.0
        %337 = vmatpush1.msra.mxu0 0.0
        %338 = vmatprep.subr.mxu0 0.0
        %339 = vmatpush1.msra.mxu0 0.0
        %340 = vmatprep.subr.mxu0 0.0
        %341 = vmatpush1.msra.mxu0 0.0
        %342 = vmatprep.subr.mxu0 0.0
        %343 = vmatpush1.msra.mxu0 0.0
        %344 = vmatprep.subr.mxu0 0.0
        %345 = vmatpush1.msra.mxu0 0.0
        %346 = vmatprep.subr.mxu0 0.0
        %347 = vmatpush1.msra.mxu0 %v171
        %348 = vmatprep.subr.mxu0 0.0
        %349 = vmatpush1.msra.mxu0 %v170
        %350 = vmatprep.subr.mxu0 0.0
        %351 = vmatpush1.msra.mxu0 %v169
        %352 = vmatprep.subr.mxu0 0.0
        %353 = vmatpush1.msra.mxu0 %v168
        %354 = vmatprep.subr.mxu0 0.0
        %355 = vmatpush2.msra.mxu0 0.0
        %356 = vmatprep.subr.mxu0 0.0
        %357 = vmatpush2.msra.mxu0 0.0
        %358 = vmatprep.subr.mxu0 0.0
        %359 = vmatpush2.msra.mxu0 0.0
        %360 = vmatprep.subr.mxu0 0.0
        %361 = vmatpush2.msra.mxu0 0.0
        %362 = vmatprep.subr.mxu0 0.0
        %363 = vmatpush2.msra.mxu0 0.0
        %364 = vmatprep.subr.mxu0 0.0
        %365 = vmatpush2.msra.mxu0 0.0
        %366 = vmatprep.subr.mxu0 0.0
        %367 = vmatpush2.msra.mxu0 0.0
        %368 = vmatprep.subr.mxu0 0.0
        %369 = vmatpush2.msra.mxu0 0.0
        %370 = vmatprep.subr.mxu0 0.0
        %371 = vmatpush2.msra.mxu0 0.0
        %372 = vmatprep.subr.mxu0 0.0
        %373 = vmatpush2.msra.mxu0 0.0
        %374 = vmatprep.subr.mxu0 0.0
        %375 = vmatpush2.msra.mxu0 0.0
        %376 = vmatprep.subr.mxu0 0.0
        %377 = vmatpush2.msra.mxu0 0.0
        %378 = vmatprep.subr.mxu0 0.0
        %379 = vmatpush2.msra.mxu0 0.0
        %380 = vmatprep.subr.mxu0 0.0
        %381 = vmatpush2.msra.mxu0 0.0
        %382 = vmatprep.subr.mxu0 0.0
        %383 = vmatpush2.msra.mxu0 0.0
        %384 = vmatprep.subr.mxu0 0.0
        %385 = vmatpush2.msra.mxu0 0.0
        %386 = vmatprep.mubr.f32.mxu0 0.0
        %387 = vmatmul.mubr.f32.gmra.mxu0 %v320
        %v388 = vpop.f32.mrf.mxu0
        %v389 = vadd.f32 0.0, %v388
        %v390 = vpop.f32.mrf.mxu0
        %391 = vdwg.mxu0
        %v392 = vsel %vm247, %v243, 0
        %394 = vmatprep.subr.mxu0 0.0
        %395 = vmatpush1.msra.mxu0 0.0
        %396 = vmatprep.subr.mxu0 0.0
        %397 = vmatpush1.msra.mxu0 0.0
        %398 = vmatprep.subr.mxu0 0.0
        %399 = vmatpush1.msra.mxu0 0.0
        %400 = vmatprep.subr.mxu0 0.0
        %401 = vmatpush1.msra.mxu0 0.0
        %402 = vmatprep.subr.mxu0 0.0
        %403 = vmatpush1.msra.mxu0 0.0
        %404 = vmatprep.subr.mxu0 0.0
        %405 = vmatpush1.msra.mxu0 0.0
        %406 = vmatprep.subr.mxu0 0.0
        %407 = vmatpush1.msra.mxu0 0.0
        %408 = vmatprep.subr.mxu0 0.0
        %409 = vmatpush1.msra.mxu0 0.0
        %410 = vmatprep.subr.mxu0 0.0
        %411 = vmatpush1.msra.mxu0 0.0
        %412 = vmatprep.subr.mxu0 0.0
        %413 = vmatpush1.msra.mxu0 0.0
        %414 = vmatprep.subr.mxu0 0.0
        %415 = vmatpush1.msra.mxu0 0.0
        %416 = vmatprep.subr.mxu0 0.0
        %417 = vmatpush1.msra.mxu0 0.0
        %418 = vmatprep.subr.mxu0 0.0
        %419 = vmatpush1.msra.mxu0 %v175
        %420 = vmatprep.subr.mxu0 0.0
        %421 = vmatpush1.msra.mxu0 %v174
        %422 = vmatprep.subr.mxu0 0.0
        %423 = vmatpush1.msra.mxu0 %v173
        %424 = vmatprep.subr.mxu0 0.0
        %425 = vmatpush1.msra.mxu0 %v172
        %426 = vmatprep.subr.mxu0 0.0
        %427 = vmatpush2.msra.mxu0 0.0
        %428 = vmatprep.subr.mxu0 0.0
        %429 = vmatpush2.msra.mxu0 0.0
        %430 = vmatprep.subr.mxu0 0.0
        %431 = vmatpush2.msra.mxu0 0.0
        %432 = vmatprep.subr.mxu0 0.0
        %433 = vmatpush2.msra.mxu0 0.0
        %434 = vmatprep.subr.mxu0 0.0
        %435 = vmatpush2.msra.mxu0 0.0
        %436 = vmatprep.subr.mxu0 0.0
        %437 = vmatpush2.msra.mxu0 0.0
        %438 = vmatprep.subr.mxu0 0.0
        %439 = vmatpush2.msra.mxu0 0.0
        %440 = vmatprep.subr.mxu0 0.0
        %441 = vmatpush2.msra.mxu0 0.0
        %442 = vmatprep.subr.mxu0 0.0
        %443 = vmatpush2.msra.mxu0 0.0
        %444 = vmatprep.subr.mxu0 0.0
        %445 = vmatpush2.msra.mxu0 0.0
        %446 = vmatprep.subr.mxu0 0.0
        %447 = vmatpush2.msra.mxu0 0.0
        %448 = vmatprep.subr.mxu0 0.0
        %449 = vmatpush2.msra.mxu0 0.0
        %450 = vmatprep.subr.mxu0 0.0
        %451 = vmatpush2.msra.mxu0 0.0
        %452 = vmatprep.subr.mxu0 0.0
        %453 = vmatpush2.msra.mxu0 0.0
        %454 = vmatprep.subr.mxu0 0.0
        %455 = vmatpush2.msra.mxu0 0.0
        %456 = vmatprep.subr.mxu0 0.0
        %457 = vmatpush2.msra.mxu0 0.0
        %458 = vmatprep.mubr.f32.mxu0 0.0
        %459 = vmatmul.mubr.f32.gmra.mxu0 %v392
        %v460 = vpop.f32.mrf.mxu0
        %v461 = vadd.f32 0.0, %v460
        %v462 = vpop.f32.mrf.mxu0
        %463 = vdwg.mxu0
        %v464 = vsel %vm247, %v245, 0
        %466 = vmatprep.subr.mxu0 0.0
        %467 = vmatpush1.msra.mxu0 0.0
        %468 = vmatprep.subr.mxu0 0.0
        %469 = vmatpush1.msra.mxu0 0.0
        %470 = vmatprep.subr.mxu0 0.0
        %471 = vmatpush1.msra.mxu0 0.0
        %472 = vmatprep.subr.mxu0 0.0
        %473 = vmatpush1.msra.mxu0 0.0
        %474 = vmatprep.subr.mxu0 0.0
        %475 = vmatpush1.msra.mxu0 0.0
        %476 = vmatprep.subr.mxu0 0.0
        %477 = vmatpush1.msra.mxu0 0.0
        %478 = vmatprep.subr.mxu0 0.0
        %479 = vmatpush1.msra.mxu0 0.0
        %480 = vmatprep.subr.mxu0 0.0
        %481 = vmatpush1.msra.mxu0 0.0
        %482 = vmatprep.subr.mxu0 0.0
        %483 = vmatpush1.msra.mxu0 0.0
        %484 = vmatprep.subr.mxu0 0.0
        %485 = vmatpush1.msra.mxu0 0.0
        %486 = vmatprep.subr.mxu0 0.0
        %487 = vmatpush1.msra.mxu0 0.0
        %488 = vmatprep.subr.mxu0 0.0
        %489 = vmatpush1.msra.mxu0 0.0
        %490 = vmatprep.subr.mxu0 0.0
        %491 = vmatpush1.msra.mxu0 %v179
        %492 = vmatprep.subr.mxu0 0.0
        %493 = vmatpush1.msra.mxu0 %v178
        %494 = vmatprep.subr.mxu0 0.0
        %495 = vmatpush1.msra.mxu0 %v177
        %496 = vmatprep.subr.mxu0 0.0
        %497 = vmatpush1.msra.mxu0 %v176
        %498 = vmatprep.subr.mxu0 0.0
        %499 = vmatpush2.msra.mxu0 0.0
        %500 = vmatprep.subr.mxu0 0.0
        %501 = vmatpush2.msra.mxu0 0.0
        %502 = vmatprep.subr.mxu0 0.0
        %503 = vmatpush2.msra.mxu0 0.0
        %504 = vmatprep.subr.mxu0 0.0
        %505 = vmatpush2.msra.mxu0 0.0
        %506 = vmatprep.subr.mxu0 0.0
        %507 = vmatpush2.msra.mxu0 0.0
        %508 = vmatprep.subr.mxu0 0.0
        %509 = vmatpush2.msra.mxu0 0.0
        %510 = vmatprep.subr.mxu0 0.0
        %511 = vmatpush2.msra.mxu0 0.0
        %512 = vmatprep.subr.mxu0 0.0
        %513 = vmatpush2.msra.mxu0 0.0
        %514 = vmatprep.subr.mxu0 0.0
        %515 = vmatpush2.msra.mxu0 0.0
        %516 = vmatprep.subr.mxu0 0.0
        %517 = vmatpush2.msra.mxu0 0.0
        %518 = vmatprep.subr.mxu0 0.0
        %519 = vmatpush2.msra.mxu0 0.0
        %520 = vmatprep.subr.mxu0 0.0
        %521 = vmatpush2.msra.mxu0 0.0
        %522 = vmatprep.subr.mxu0 0.0
        %523 = vmatpush2.msra.mxu0 0.0
        %524 = vmatprep.subr.mxu0 0.0
        %525 = vmatpush2.msra.mxu0 0.0
        %526 = vmatprep.subr.mxu0 0.0
        %527 = vmatpush2.msra.mxu0 0.0
        %528 = vmatprep.subr.mxu0 0.0
        %529 = vmatpush2.msra.mxu0 0.0
        %530 = vmatprep.mubr.f32.mxu0 0.0
        %531 = vmatmul.mubr.f32.gmra.mxu0 %v464
        %v532 = vpop.f32.mrf.mxu0
        %v533 = vadd.f32 0.0, %v532
        %v534 = vpop.f32.mrf.mxu0
        %535 = vdwg.mxu0
        %v536 = vsel %vm247, %v228, 0
        %538 = vmatprep.subr.mxu0 0.0
        %539 = vmatpush1.msra.mxu0 0.0
        %540 = vmatprep.subr.mxu0 0.0
        %541 = vmatpush1.msra.mxu0 0.0
        %542 = vmatprep.subr.mxu0 0.0
        %543 = vmatpush1.msra.mxu0 0.0
        %544 = vmatprep.subr.mxu0 0.0
        %545 = vmatpush1.msra.mxu0 0.0
        %546 = vmatprep.subr.mxu0 0.0
        %547 = vmatpush1.msra.mxu0 0.0
        %548 = vmatprep.subr.mxu0 0.0
        %549 = vmatpush1.msra.mxu0 0.0
        %550 = vmatprep.subr.mxu0 0.0
        %551 = vmatpush1.msra.mxu0 0.0
        %552 = vmatprep.subr.mxu0 0.0
        %553 = vmatpush1.msra.mxu0 0.0
        %554 = vmatprep.subr.mxu0 0.0
        %555 = vmatpush1.msra.mxu0 0.0
        %556 = vmatprep.subr.mxu0 0.0
        %557 = vmatpush1.msra.mxu0 0.0
        %558 = vmatprep.subr.mxu0 0.0
        %559 = vmatpush1.msra.mxu0 0.0
        %560 = vmatprep.subr.mxu0 0.0
        %561 = vmatpush1.msra.mxu0 0.0
        %562 = vmatprep.subr.mxu0 0.0
        %563 = vmatpush1.msra.mxu0 %v183
        %564 = vmatprep.subr.mxu0 0.0
        %565 = vmatpush1.msra.mxu0 %v182
        %566 = vmatprep.subr.mxu0 0.0
        %567 = vmatpush1.msra.mxu0 %v181
        %568 = vmatprep.subr.mxu0 0.0
        %569 = vmatpush1.msra.mxu0 %v180
        %570 = vmatprep.subr.mxu0 0.0
        %571 = vmatpush2.msra.mxu0 0.0
        %572 = vmatprep.subr.mxu0 0.0
        %573 = vmatpush2.msra.mxu0 0.0
        %574 = vmatprep.subr.mxu0 0.0
        %575 = vmatpush2.msra.mxu0 0.0
        %576 = vmatprep.subr.mxu0 0.0
        %577 = vmatpush2.msra.mxu0 0.0
        %578 = vmatprep.subr.mxu0 0.0
        %579 = vmatpush2.msra.mxu0 0.0
        %580 = vmatprep.subr.mxu0 0.0
        %581 = vmatpush2.msra.mxu0 0.0
        %582 = vmatprep.subr.mxu0 0.0
        %583 = vmatpush2.msra.mxu0 0.0
        %584 = vmatprep.subr.mxu0 0.0
        %585 = vmatpush2.msra.mxu0 0.0
        %586 = vmatprep.subr.mxu0 0.0
        %587 = vmatpush2.msra.mxu0 0.0
        %588 = vmatprep.subr.mxu0 0.0
        %589 = vmatpush2.msra.mxu0 0.0
        %590 = vmatprep.subr.mxu0 0.0
        %591 = vmatpush2.msra.mxu0 0.0
        %592 = vmatprep.subr.mxu0 0.0
        %593 = vmatpush2.msra.mxu0 0.0
        %594 = vmatprep.subr.mxu0 0.0
        %595 = vmatpush2.msra.mxu0 0.0
        %596 = vmatprep.subr.mxu0 0.0
        %597 = vmatpush2.msra.mxu0 0.0
        %598 = vmatprep.subr.mxu0 0.0
        %599 = vmatpush2.msra.mxu0 0.0
        %600 = vmatprep.subr.mxu0 0.0
        %601 = vmatpush2.msra.mxu0 0.0
        %602 = vmatprep.mubr.f32.mxu0 0.0
        %603 = vmatmul.mubr.f32.gmra.mxu0 %v536
        %v604 = vpop.f32.mrf.mxu0
        %v605 = vadd.f32 0.0, %v604
        %v606 = vpop.f32.mrf.mxu0
        %607 = vdwg.mxu0
        %v608 = vsel %vm247, %v242, 0
        %610 = vmatprep.subr.mxu0 0.0
        %611 = vmatpush1.msra.mxu0 0.0
        %612 = vmatprep.subr.mxu0 0.0
        %613 = vmatpush1.msra.mxu0 0.0
        %614 = vmatprep.subr.mxu0 0.0
        %615 = vmatpush1.msra.mxu0 0.0
        %616 = vmatprep.subr.mxu0 0.0
        %617 = vmatpush1.msra.mxu0 0.0
        %618 = vmatprep.subr.mxu0 0.0
        %619 = vmatpush1.msra.mxu0 0.0
        %620 = vmatprep.subr.mxu0 0.0
        %621 = vmatpush1.msra.mxu0 0.0
        %622 = vmatprep.subr.mxu0 0.0
        %623 = vmatpush1.msra.mxu0 0.0
        %624 = vmatprep.subr.mxu0 0.0
        %625 = vmatpush1.msra.mxu0 0.0
        %626 = vmatprep.subr.mxu0 0.0
        %627 = vmatpush1.msra.mxu0 0.0
        %628 = vmatprep.subr.mxu0 0.0
        %629 = vmatpush1.msra.mxu0 0.0
        %630 = vmatprep.subr.mxu0 0.0
        %631 = vmatpush1.msra.mxu0 0.0
        %632 = vmatprep.subr.mxu0 0.0
        %633 = vmatpush1.msra.mxu0 0.0
        %634 = vmatprep.subr.mxu0 0.0
        %635 = vmatpush1.msra.mxu0 %v187
        %636 = vmatprep.subr.mxu0 0.0
        %637 = vmatpush1.msra.mxu0 %v186
        %638 = vmatprep.subr.mxu0 0.0
        %639 = vmatpush1.msra.mxu0 %v185
        %640 = vmatprep.subr.mxu0 0.0
        %641 = vmatpush1.msra.mxu0 %v184
        %642 = vmatprep.subr.mxu0 0.0
        %643 = vmatpush2.msra.mxu0 0.0
        %644 = vmatprep.subr.mxu0 0.0
        %645 = vmatpush2.msra.mxu0 0.0
        %646 = vmatprep.subr.mxu0 0.0
        %647 = vmatpush2.msra.mxu0 0.0
        %648 = vmatprep.subr.mxu0 0.0
        %649 = vmatpush2.msra.mxu0 0.0
        %650 = vmatprep.subr.mxu0 0.0
        %651 = vmatpush2.msra.mxu0 0.0
        %652 = vmatprep.subr.mxu0 0.0
        %653 = vmatpush2.msra.mxu0 0.0
        %654 = vmatprep.subr.mxu0 0.0
        %655 = vmatpush2.msra.mxu0 0.0
        %656 = vmatprep.subr.mxu0 0.0
        %657 = vmatpush2.msra.mxu0 0.0
        %658 = vmatprep.subr.mxu0 0.0
        %659 = vmatpush2.msra.mxu0 0.0
        %660 = vmatprep.subr.mxu0 0.0
        %661 = vmatpush2.msra.mxu0 0.0
        %662 = vmatprep.subr.mxu0 0.0
        %663 = vmatpush2.msra.mxu0 0.0
        %664 = vmatprep.subr.mxu0 0.0
        %665 = vmatpush2.msra.mxu0 0.0
        %666 = vmatprep.subr.mxu0 0.0
        %667 = vmatpush2.msra.mxu0 0.0
        %668 = vmatprep.subr.mxu0 0.0
        %669 = vmatpush2.msra.mxu0 0.0
        %670 = vmatprep.subr.mxu0 0.0
        %671 = vmatpush2.msra.mxu0 0.0
        %672 = vmatprep.subr.mxu0 0.0
        %673 = vmatpush2.msra.mxu0 0.0
        %674 = vmatprep.mubr.f32.mxu0 0.0
        %675 = vmatmul.mubr.f32.gmra.mxu0 %v608
        %v676 = vpop.f32.mrf.mxu0
        %v677 = vadd.f32 0.0, %v676
        %v678 = vpop.f32.mrf.mxu0
        %679 = vdwg.mxu0
        %v680 = vsel %vm247, %v244, 0
        %682 = vmatprep.subr.mxu0 0.0
        %683 = vmatpush1.msra.mxu0 0.0
        %684 = vmatprep.subr.mxu0 0.0
        %685 = vmatpush1.msra.mxu0 0.0
        %686 = vmatprep.subr.mxu0 0.0
        %687 = vmatpush1.msra.mxu0 0.0
        %688 = vmatprep.subr.mxu0 0.0
        %689 = vmatpush1.msra.mxu0 0.0
        %690 = vmatprep.subr.mxu0 0.0
        %691 = vmatpush1.msra.mxu0 0.0
        %692 = vmatprep.subr.mxu0 0.0
        %693 = vmatpush1.msra.mxu0 0.0
        %694 = vmatprep.subr.mxu0 0.0
        %695 = vmatpush1.msra.mxu0 0.0
        %696 = vmatprep.subr.mxu0 0.0
        %697 = vmatpush1.msra.mxu0 0.0
        %698 = vmatprep.subr.mxu0 0.0
        %699 = vmatpush1.msra.mxu0 0.0
        %700 = vmatprep.subr.mxu0 0.0
        %701 = vmatpush1.msra.mxu0 0.0
        %702 = vmatprep.subr.mxu0 0.0
        %703 = vmatpush1.msra.mxu0 0.0
        %704 = vmatprep.subr.mxu0 0.0
        %705 = vmatpush1.msra.mxu0 0.0
        %706 = vmatprep.subr.mxu0 0.0
        %707 = vmatpush1.msra.mxu0 %v191
        %708 = vmatprep.subr.mxu0 0.0
        %709 = vmatpush1.msra.mxu0 %v190
        %710 = vmatprep.subr.mxu0 0.0
        %711 = vmatpush1.msra.mxu0 %v189
        %712 = vmatprep.subr.mxu0 0.0
        %713 = vmatpush1.msra.mxu0 %v188
        %714 = vmatprep.subr.mxu0 0.0
        %715 = vmatpush2.msra.mxu0 0.0
        %716 = vmatprep.subr.mxu0 0.0
        %717 = vmatpush2.msra.mxu0 0.0
        %718 = vmatprep.subr.mxu0 0.0
        %719 = vmatpush2.msra.mxu0 0.0
        %720 = vmatprep.subr.mxu0 0.0
        %721 = vmatpush2.msra.mxu0 0.0
        %722 = vmatprep.subr.mxu0 0.0
        %723 = vmatpush2.msra.mxu0 0.0
        %724 = vmatprep.subr.mxu0 0.0
        %725 = vmatpush2.msra.mxu0 0.0
        %726 = vmatprep.subr.mxu0 0.0
        %727 = vmatpush2.msra.mxu0 0.0
        %728 = vmatprep.subr.mxu0 0.0
        %729 = vmatpush2.msra.mxu0 0.0
        %730 = vmatprep.subr.mxu0 0.0
        %731 = vmatpush2.msra.mxu0 0.0
        %732 = vmatprep.subr.mxu0 0.0
        %733 = vmatpush2.msra.mxu0 0.0
        %734 = vmatprep.subr.mxu0 0.0
        %735 = vmatpush2.msra.mxu0 0.0
        %736 = vmatprep.subr.mxu0 0.0
        %737 = vmatpush2.msra.mxu0 0.0
        %738 = vmatprep.subr.mxu0 0.0
        %739 = vmatpush2.msra.mxu0 0.0
        %740 = vmatprep.subr.mxu0 0.0
        %741 = vmatpush2.msra.mxu0 0.0
        %742 = vmatprep.subr.mxu0 0.0
        %743 = vmatpush2.msra.mxu0 0.0
        %744 = vmatprep.subr.mxu0 0.0
        %745 = vmatpush2.msra.mxu0 0.0
        %746 = vmatprep.mubr.f32.mxu0 0.0
        %747 = vmatmul.mubr.f32.gmra.mxu0 %v680
        %v748 = vpop.f32.mrf.mxu0
        %v749 = vadd.f32 0.0, %v748
        %v750 = vpop.f32.mrf.mxu0
        %751 = vdwg.mxu0
        %v752 = vsel %vm247, %v246, 0
        %754 = vmatprep.subr.mxu0 0.0
        %755 = vmatpush1.msra.mxu0 0.0
        %756 = vmatprep.subr.mxu0 0.0
        %757 = vmatpush1.msra.mxu0 0.0
        %758 = vmatprep.subr.mxu0 0.0
        %759 = vmatpush1.msra.mxu0 0.0
        %760 = vmatprep.subr.mxu0 0.0
        %761 = vmatpush1.msra.mxu0 0.0
        %762 = vmatprep.subr.mxu0 0.0
        %763 = vmatpush1.msra.mxu0 0.0
        %764 = vmatprep.subr.mxu0 0.0
        %765 = vmatpush1.msra.mxu0 0.0
        %766 = vmatprep.subr.mxu0 0.0
        %767 = vmatpush1.msra.mxu0 0.0
        %768 = vmatprep.subr.mxu0 0.0
        %769 = vmatpush1.msra.mxu0 0.0
        %770 = vmatprep.subr.mxu0 0.0
        %771 = vmatpush1.msra.mxu0 0.0
        %772 = vmatprep.subr.mxu0 0.0
        %773 = vmatpush1.msra.mxu0 0.0
        %774 = vmatprep.subr.mxu0 0.0
        %775 = vmatpush1.msra.mxu0 0.0
        %776 = vmatprep.subr.mxu0 0.0
        %777 = vmatpush1.msra.mxu0 0.0
        %778 = vmatprep.subr.mxu0 0.0
        %779 = vmatpush1.msra.mxu0 %v195
        %780 = vmatprep.subr.mxu0 0.0
        %781 = vmatpush1.msra.mxu0 %v194
        %782 = vmatprep.subr.mxu0 0.0
        %783 = vmatpush1.msra.mxu0 %v193
        %784 = vmatprep.subr.mxu0 0.0
        %785 = vmatpush1.msra.mxu0 %v192
        %786 = vmatprep.subr.mxu0 0.0
        %787 = vmatpush2.msra.mxu0 0.0
        %788 = vmatprep.subr.mxu0 0.0
        %789 = vmatpush2.msra.mxu0 0.0
        %790 = vmatprep.subr.mxu0 0.0
        %791 = vmatpush2.msra.mxu0 0.0
        %792 = vmatprep.subr.mxu0 0.0
        %793 = vmatpush2.msra.mxu0 0.0
        %794 = vmatprep.subr.mxu0 0.0
        %795 = vmatpush2.msra.mxu0 0.0
        %796 = vmatprep.subr.mxu0 0.0
        %797 = vmatpush2.msra.mxu0 0.0
        %798 = vmatprep.subr.mxu0 0.0
        %799 = vmatpush2.msra.mxu0 0.0
        %800 = vmatprep.subr.mxu0 0.0
        %801 = vmatpush2.msra.mxu0 0.0
        %802 = vmatprep.subr.mxu0 0.0
        %803 = vmatpush2.msra.mxu0 0.0
        %804 = vmatprep.subr.mxu0 0.0
        %805 = vmatpush2.msra.mxu0 0.0
        %806 = vmatprep.subr.mxu0 0.0
        %807 = vmatpush2.msra.mxu0 0.0
        %808 = vmatprep.subr.mxu0 0.0
        %809 = vmatpush2.msra.mxu0 0.0
        %810 = vmatprep.subr.mxu0 0.0
        %811 = vmatpush2.msra.mxu0 0.0
        %812 = vmatprep.subr.mxu0 0.0
        %813 = vmatpush2.msra.mxu0 0.0
        %814 = vmatprep.subr.mxu0 0.0
        %815 = vmatpush2.msra.mxu0 0.0
        %816 = vmatprep.subr.mxu0 0.0
        %817 = vmatpush2.msra.mxu0 0.0
        %818 = vmatprep.mubr.f32.mxu0 0.0
        %819 = vmatmul.mubr.f32.gmra.mxu0 %v752
        %v820 = vpop.f32.mrf.mxu0
        %v821 = vadd.f32 0.0, %v820
        %v822 = vpop.f32.mrf.mxu0
        %823 = vdwg.mxu0
        %vm824 = vcmask 122880
        %v825 = vsel %vm824, %v317, -inf
        %826 = vmax.xlane.f32.xlu0 %v825
        %v827 = vpop.xlane.xlu0 %826
        %v828 = vsel %vm824, %v389, -inf
        %829 = vmax.xlane.f32.xlu0 %v828
        %v830 = vpop.xlane.xlu0 %829
        %v831 = vsel %vm824, %v461, -inf
        %832 = vmax.xlane.f32.xlu0 %v831
        %v833 = vpop.xlane.xlu0 %832
        %v834 = vsel %vm824, %v533, -inf
        %835 = vmax.xlane.f32.xlu0 %v834
        %v836 = vpop.xlane.xlu0 %835
        %v837 = vsel %vm824, %v605, -inf
        %838 = vmax.xlane.f32.xlu0 %v837
        %v839 = vpop.xlane.xlu0 %838
        %v840 = vsel %vm824, %v677, -inf
        %841 = vmax.xlane.f32.xlu0 %v840
        %v842 = vpop.xlane.xlu0 %841
        %v843 = vsel %vm824, %v749, -inf
        %844 = vmax.xlane.f32.xlu0 %v843
        %v845 = vpop.xlane.xlu0 %844
        %v846 = vsel %vm824, %v821, -inf
        %847 = vmax.xlane.f32.xlu0 %v846
        %v848 = vpop.xlane.xlu0 %847
        %v849 = vsub.f32 %v317, %v827
        %v850 = vsub.f32 %v389, %v830
        %v851 = vsub.f32 %v461, %v833
        %v852 = vsub.f32 %v533, %v836
        %v853 = vsub.f32 %v605, %v839
        %v854 = vsub.f32 %v677, %v842
        %v855 = vsub.f32 %v749, %v845
        %v856 = vsub.f32 %v821, %v848
        %v857 = vmul.f32 %v849, 1.442695
        %v858 = vpow.pop %v857
        %v859 = vmul.f32 %v850, 1.442695
        %v860 = vpow.pop %v859
        %v861 = vmul.f32 %v851, 1.442695
        %v862 = vpow.pop %v861
        %v863 = vmul.f32 %v852, 1.442695
        %v864 = vpow.pop %v863
        %v865 = vmul.f32 %v853, 1.442695
        %v866 = vpow.pop %v865
        %v867 = vmul.f32 %v854, 1.442695
        %v868 = vpow.pop %v867
        %v869 = vmul.f32 %v855, 1.442695
        %v870 = vpow.pop %v869
        %v871 = vmul.f32 %v856, 1.442695
        %v872 = vpow.pop %v871
        %v873 = vsel %vm824, %v858, 0.0
        %874 = vadd.xlane.f32.xlu0 %v873
        %v875 = vpop.xlane.xlu0 %874
        %v876 = vsel %vm824, %v860, 0.0
        %877 = vadd.xlane.f32.xlu0 %v876
        %v878 = vpop.xlane.xlu0 %877
        %v879 = vsel %vm824, %v862, 0.0
        %880 = vadd.xlane.f32.xlu0 %v879
        %v881 = vpop.xlane.xlu0 %880
        %v882 = vsel %vm824, %v864, 0.0
        %883 = vadd.xlane.f32.xlu0 %v882
        %v884 = vpop.xlane.xlu0 %883
        %v885 = vsel %vm824, %v866, 0.0
        %886 = vadd.xlane.f32.xlu0 %v885
        %v887 = vpop.xlane.xlu0 %886
        %v888 = vsel %vm824, %v868, 0.0
        %889 = vadd.xlane.f32.xlu0 %v888
        %v890 = vpop.xlane.xlu0 %889
        %v891 = vsel %vm824, %v870, 0.0
        %892 = vadd.xlane.f32.xlu0 %v891
        %v893 = vpop.xlane.xlu0 %892
        %v894 = vsel %vm824, %v872, 0.0
        %895 = vadd.xlane.f32.xlu0 %v894
        %v896 = vpop.xlane.xlu0 %895
        %v897 = vrcp.pop %v875
        %v898 = vmul.f32 %v858, %v897
        %v899 = vrcp.pop %v878
        %v900 = vmul.f32 %v860, %v899
        %v901 = vrcp.pop %v881
        %v902 = vmul.f32 %v862, %v901
        %v903 = vrcp.pop %v884
        %v904 = vmul.f32 %v864, %v903
        %v905 = vrcp.pop %v887
        %v906 = vmul.f32 %v866, %v905
        %v907 = vrcp.pop %v890
        %v908 = vmul.f32 %v868, %v907
        %v909 = vrcp.pop %v893
        %v910 = vmul.f32 %v870, %v909
        %v911 = vrcp.pop %v896
        %v912 = vmul.f32 %v872, %v911
        %vm913 = vcmask 130048
        %v915 = vsel %vm913, %v898, 0
        %v918 = vsel %vm913, %v164, 0
        %v921 = vsel %vm913, %v165, 0
        %v924 = vsel %vm913, %v166, 0
        %v927 = vsel %vm913, %v167, 0
        %929 = vmatprep.subr.mxu0 0.0
        %930 = vmatpush1.xpose.msra.mxu0 0.0
        %931 = vmatprep.subr.mxu0 0.0
        %932 = vmatpush1.xpose.msra.mxu0 0.0
        %933 = vmatprep.subr.mxu0 0.0
        %934 = vmatpush1.xpose.msra.mxu0 0.0
        %935 = vmatprep.subr.mxu0 0.0
        %936 = vmatpush1.xpose.msra.mxu0 0.0
        %937 = vmatprep.subr.mxu0 0.0
        %938 = vmatpush1.xpose.msra.mxu0 0.0
        %939 = vmatprep.subr.mxu0 0.0
        %940 = vmatpush1.xpose.msra.mxu0 0.0
        %941 = vmatprep.subr.mxu0 0.0
        %942 = vmatpush1.xpose.msra.mxu0 0.0
        %943 = vmatprep.subr.mxu0 0.0
        %944 = vmatpush1.xpose.msra.mxu0 0.0
        %945 = vmatprep.subr.mxu0 0.0
        %946 = vmatpush1.xpose.msra.mxu0 0.0
        %947 = vmatprep.subr.mxu0 0.0
        %948 = vmatpush1.xpose.msra.mxu0 0.0
        %949 = vmatprep.subr.mxu0 0.0
        %950 = vmatpush1.xpose.msra.mxu0 0.0
        %951 = vmatprep.subr.mxu0 0.0
        %952 = vmatpush1.xpose.msra.mxu0 0.0
        %953 = vmatprep.subr.mxu0 0.0
        %954 = vmatpush1.xpose.msra.mxu0 %v927
        %955 = vmatprep.subr.mxu0 0.0
        %956 = vmatpush1.xpose.msra.mxu0 %v924
        %957 = vmatprep.subr.mxu0 0.0
        %958 = vmatpush1.xpose.msra.mxu0 %v921
        %959 = vmatprep.subr.mxu0 0.0
        %960 = vmatpush1.xpose.msra.mxu0 %v918
        %961 = vmatprep.subr.mxu0 0.0
        %962 = vmatpush2.xpose.msra.mxu0 0.0
        %963 = vmatprep.subr.mxu0 0.0
        %964 = vmatpush2.xpose.msra.mxu0 0.0
        %965 = vmatprep.subr.mxu0 0.0
        %966 = vmatpush2.xpose.msra.mxu0 0.0
        %967 = vmatprep.subr.mxu0 0.0
        %968 = vmatpush2.xpose.msra.mxu0 0.0
        %969 = vmatprep.subr.mxu0 0.0
        %970 = vmatpush2.xpose.msra.mxu0 0.0
        %971 = vmatprep.subr.mxu0 0.0
        %972 = vmatpush2.xpose.msra.mxu0 0.0
        %973 = vmatprep.subr.mxu0 0.0
        %974 = vmatpush2.xpose.msra.mxu0 0.0
        %975 = vmatprep.subr.mxu0 0.0
        %976 = vmatpush2.xpose.msra.mxu0 0.0
        %977 = vmatprep.subr.mxu0 0.0
        %978 = vmatpush2.xpose.msra.mxu0 0.0
        %979 = vmatprep.subr.mxu0 0.0
        %980 = vmatpush2.xpose.msra.mxu0 0.0
        %981 = vmatprep.subr.mxu0 0.0
        %982 = vmatpush2.xpose.msra.mxu0 0.0
        %983 = vmatprep.subr.mxu0 0.0
        %984 = vmatpush2.xpose.msra.mxu0 0.0
        %985 = vmatprep.subr.mxu0 0.0
        %986 = vmatpush2.xpose.msra.mxu0 0.0
        %987 = vmatprep.subr.mxu0 0.0
        %988 = vmatpush2.xpose.msra.mxu0 0.0
        %989 = vmatprep.subr.mxu0 0.0
        %990 = vmatpush2.xpose.msra.mxu0 0.0
        %991 = vmatprep.subr.mxu0 0.0
        %992 = vmatpush2.xpose.msra.mxu0 0.0
        %993 = vmatprep.mubr.f32.mxu0 0.0
        %994 = vmatmul.mubr.f32.gmra.mxu0 %v915
        %v995 = vpop.f32.mrf.mxu0
        %v996 = vadd.f32 0.0, %v995
        %v997 = vpop.f32.mrf.mxu0
        %998 = vdwg.mxu0
        %v1000 = vsel %vm913, %v900, 0
        %v1003 = vsel %vm913, %v168, 0
        %v1006 = vsel %vm913, %v169, 0
        %v1009 = vsel %vm913, %v170, 0
        %v1012 = vsel %vm913, %v171, 0
        %1014 = vmatprep.subr.mxu0 0.0
        %1015 = vmatpush1.xpose.msra.mxu0 0.0
        %1016 = vmatprep.subr.mxu0 0.0
        %1017 = vmatpush1.xpose.msra.mxu0 0.0
        %1018 = vmatprep.subr.mxu0 0.0
        %1019 = vmatpush1.xpose.msra.mxu0 0.0
        %1020 = vmatprep.subr.mxu0 0.0
        %1021 = vmatpush1.xpose.msra.mxu0 0.0
        %1022 = vmatprep.subr.mxu0 0.0
        %1023 = vmatpush1.xpose.msra.mxu0 0.0
        %1024 = vmatprep.subr.mxu0 0.0
        %1025 = vmatpush1.xpose.msra.mxu0 0.0
        %1026 = vmatprep.subr.mxu0 0.0
        %1027 = vmatpush1.xpose.msra.mxu0 0.0
        %1028 = vmatprep.subr.mxu0 0.0
        %1029 = vmatpush1.xpose.msra.mxu0 0.0
        %1030 = vmatprep.subr.mxu0 0.0
        %1031 = vmatpush1.xpose.msra.mxu0 0.0
        %1032 = vmatprep.subr.mxu0 0.0
        %1033 = vmatpush1.xpose.msra.mxu0 0.0
        %1034 = vmatprep.subr.mxu0 0.0
        %1035 = vmatpush1.xpose.msra.mxu0 0.0
        %1036 = vmatprep.subr.mxu0 0.0
        %1037 = vmatpush1.xpose.msra.mxu0 0.0
        %1038 = vmatprep.subr.mxu0 0.0
        %1039 = vmatpush1.xpose.msra.mxu0 %v1012
        %1040 = vmatprep.subr.mxu0 0.0
        %1041 = vmatpush1.xpose.msra.mxu0 %v1009
        %1042 = vmatprep.subr.mxu0 0.0
        %1043 = vmatpush1.xpose.msra.mxu0 %v1006
        %1044 = vmatprep.subr.mxu0 0.0
        %1045 = vmatpush1.xpose.msra.mxu0 %v1003
        %1046 = vmatprep.subr.mxu0 0.0
        %1047 = vmatpush2.xpose.msra.mxu0 0.0
        %1048 = vmatprep.subr.mxu0 0.0
        %1049 = vmatpush2.xpose.msra.mxu0 0.0
        %1050 = vmatprep.subr.mxu0 0.0
        %1051 = vmatpush2.xpose.msra.mxu0 0.0
        %1052 = vmatprep.subr.mxu0 0.0
        %1053 = vmatpush2.xpose.msra.mxu0 0.0
        %1054 = vmatprep.subr.mxu0 0.0
        %1055 = vmatpush2.xpose.msra.mxu0 0.0
        %1056 = vmatprep.subr.mxu0 0.0
        %1057 = vmatpush2.xpose.msra.mxu0 0.0
        %1058 = vmatprep.subr.mxu0 0.0
        %1059 = vmatpush2.xpose.msra.mxu0 0.0
        %1060 = vmatprep.subr.mxu0 0.0
        %1061 = vmatpush2.xpose.msra.mxu0 0.0
        %1062 = vmatprep.subr.mxu0 0.0
        %1063 = vmatpush2.xpose.msra.mxu0 0.0
        %1064 = vmatprep.subr.mxu0 0.0
        %1065 = vmatpush2.xpose.msra.mxu0 0.0
        %1066 = vmatprep.subr.mxu0 0.0
        %1067 = vmatpush2.xpose.msra.mxu0 0.0
        %1068 = vmatprep.subr.mxu0 0.0
        %1069 = vmatpush2.xpose.msra.mxu0 0.0
        %1070 = vmatprep.subr.mxu0 0.0
        %1071 = vmatpush2.xpose.msra.mxu0 0.0
        %1072 = vmatprep.subr.mxu0 0.0
        %1073 = vmatpush2.xpose.msra.mxu0 0.0
        %1074 = vmatprep.subr.mxu0 0.0
        %1075 = vmatpush2.xpose.msra.mxu0 0.0
        %1076 = vmatprep.subr.mxu0 0.0
        %1077 = vmatpush2.xpose.msra.mxu0 0.0
        %1078 = vmatprep.mubr.f32.mxu0 0.0
        %1079 = vmatmul.mubr.f32.gmra.mxu0 %v1000
        %v1080 = vpop.f32.mrf.mxu0
        %v1081 = vadd.f32 0.0, %v1080
        %v1082 = vpop.f32.mrf.mxu0
        %1083 = vdwg.mxu0
        %v1085 = vsel %vm913, %v902, 0
        %v1088 = vsel %vm913, %v172, 0
        %v1091 = vsel %vm913, %v173, 0
        %v1094 = vsel %vm913, %v174, 0
        %v1097 = vsel %vm913, %v175, 0
        %1099 = vmatprep.subr.mxu0 0.0
        %1100 = vmatpush1.xpose.msra.mxu0 0.0
        %1101 = vmatprep.subr.mxu0 0.0
        %1102 = vmatpush1.xpose.msra.mxu0 0.0
        %1103 = vmatprep.subr.mxu0 0.0
        %1104 = vmatpush1.xpose.msra.mxu0 0.0
        %1105 = vmatprep.subr.mxu0 0.0
        %1106 = vmatpush1.xpose.msra.mxu0 0.0
        %1107 = vmatprep.subr.mxu0 0.0
        %1108 = vmatpush1.xpose.msra.mxu0 0.0
        %1109 = vmatprep.subr.mxu0 0.0
        %1110 = vmatpush1.xpose.msra.mxu0 0.0
        %1111 = vmatprep.subr.mxu0 0.0
        %1112 = vmatpush1.xpose.msra.mxu0 0.0
        %1113 = vmatprep.subr.mxu0 0.0
        %1114 = vmatpush1.xpose.msra.mxu0 0.0
        %1115 = vmatprep.subr.mxu0 0.0
        %1116 = vmatpush1.xpose.msra.mxu0 0.0
        %1117 = vmatprep.subr.mxu0 0.0
        %1118 = vmatpush1.xpose.msra.mxu0 0.0
        %1119 = vmatprep.subr.mxu0 0.0
        %1120 = vmatpush1.xpose.msra.mxu0 0.0
        %1121 = vmatprep.subr.mxu0 0.0
        %1122 = vmatpush1.xpose.msra.mxu0 0.0
        %1123 = vmatprep.subr.mxu0 0.0
        %1124 = vmatpush1.xpose.msra.mxu0 %v1097
        %1125 = vmatprep.subr.mxu0 0.0
        %1126 = vmatpush1.xpose.msra.mxu0 %v1094
        %1127 = vmatprep.subr.mxu0 0.0
        %1128 = vmatpush1.xpose.msra.mxu0 %v1091
        %1129 = vmatprep.subr.mxu0 0.0
        %1130 = vmatpush1.xpose.msra.mxu0 %v1088
        %1131 = vmatprep.subr.mxu0 0.0
        %1132 = vmatpush2.xpose.msra.mxu0 0.0
        %1133 = vmatprep.subr.mxu0 0.0
        %1134 = vmatpush2.xpose.msra.mxu0 0.0
        %1135 = vmatprep.subr.mxu0 0.0
        %1136 = vmatpush2.xpose.msra.mxu0 0.0
        %1137 = vmatprep.subr.mxu0 0.0
        %1138 = vmatpush2.xpose.msra.mxu0 0.0
        %1139 = vmatprep.subr.mxu0 0.0
        %1140 = vmatpush2.xpose.msra.mxu0 0.0
        %1141 = vmatprep.subr.mxu0 0.0
        %1142 = vmatpush2.xpose.msra.mxu0 0.0
        %1143 = vmatprep.subr.mxu0 0.0
        %1144 = vmatpush2.xpose.msra.mxu0 0.0
        %1145 = vmatprep.subr.mxu0 0.0
        %1146 = vmatpush2.xpose.msra.mxu0 0.0
        %1147 = vmatprep.subr.mxu0 0.0
        %1148 = vmatpush2.xpose.msra.mxu0 0.0
        %1149 = vmatprep.subr.mxu0 0.0
        %1150 = vmatpush2.xpose.msra.mxu0 0.0
        %1151 = vmatprep.subr.mxu0 0.0
        %1152 = vmatpush2.xpose.msra.mxu0 0.0
        %1153 = vmatprep.subr.mxu0 0.0
        %1154 = vmatpush2.xpose.msra.mxu0 0.0
        %1155 = vmatprep.subr.mxu0 0.0
        %1156 = vmatpush2.xpose.msra.mxu0 0.0
        %1157 = vmatprep.subr.mxu0 0.0
        %1158 = vmatpush2.xpose.msra.mxu0 0.0
        %1159 = vmatprep.subr.mxu0 0.0
        %1160 = vmatpush2.xpose.msra.mxu0 0.0
        %1161 = vmatprep.subr.mxu0 0.0
        %1162 = vmatpush2.xpose.msra.mxu0 0.0
        %1163 = vmatprep.mubr.f32.mxu0 0.0
        %1164 = vmatmul.mubr.f32.gmra.mxu0 %v1085
        %v1165 = vpop.f32.mrf.mxu0
        %v1166 = vadd.f32 0.0, %v1165
        %v1167 = vpop.f32.mrf.mxu0
        %1168 = vdwg.mxu0
        %v1170 = vsel %vm913, %v904, 0
        %v1173 = vsel %vm913, %v176, 0
        %v1176 = vsel %vm913, %v177, 0
        %v1179 = vsel %vm913, %v178, 0
        %v1182 = vsel %vm913, %v179, 0
        %1184 = vmatprep.subr.mxu0 0.0
        %1185 = vmatpush1.xpose.msra.mxu0 0.0
        %1186 = vmatprep.subr.mxu0 0.0
        %1187 = vmatpush1.xpose.msra.mxu0 0.0
        %1188 = vmatprep.subr.mxu0 0.0
        %1189 = vmatpush1.xpose.msra.mxu0 0.0
        %1190 = vmatprep.subr.mxu0 0.0
        %1191 = vmatpush1.xpose.msra.mxu0 0.0
        %1192 = vmatprep.subr.mxu0 0.0
        %1193 = vmatpush1.xpose.msra.mxu0 0.0
        %1194 = vmatprep.subr.mxu0 0.0
        %1195 = vmatpush1.xpose.msra.mxu0 0.0
        %1196 = vmatprep.subr.mxu0 0.0
        %1197 = vmatpush1.xpose.msra.mxu0 0.0
        %1198 = vmatprep.subr.mxu0 0.0
        %1199 = vmatpush1.xpose.msra.mxu0 0.0
        %1200 = vmatprep.subr.mxu0 0.0
        %1201 = vmatpush1.xpose.msra.mxu0 0.0
        %1202 = vmatprep.subr.mxu0 0.0
        %1203 = vmatpush1.xpose.msra.mxu0 0.0
        %1204 = vmatprep.subr.mxu0 0.0
        %1205 = vmatpush1.xpose.msra.mxu0 0.0
        %1206 = vmatprep.subr.mxu0 0.0
        %1207 = vmatpush1.xpose.msra.mxu0 0.0
        %1208 = vmatprep.subr.mxu0 0.0
        %1209 = vmatpush1.xpose.msra.mxu0 %v1182
        %1210 = vmatprep.subr.mxu0 0.0
        %1211 = vmatpush1.xpose.msra.mxu0 %v1179
        %1212 = vmatprep.subr.mxu0 0.0
        %1213 = vmatpush1.xpose.msra.mxu0 %v1176
        %1214 = vmatprep.subr.mxu0 0.0
        %1215 = vmatpush1.xpose.msra.mxu0 %v1173
        %1216 = vmatprep.subr.mxu0 0.0
        %1217 = vmatpush2.xpose.msra.mxu0 0.0
        %1218 = vmatprep.subr.mxu0 0.0
        %1219 = vmatpush2.xpose.msra.mxu0 0.0
        %1220 = vmatprep.subr.mxu0 0.0
        %1221 = vmatpush2.xpose.msra.mxu0 0.0
        %1222 = vmatprep.subr.mxu0 0.0
        %1223 = vmatpush2.xpose.msra.mxu0 0.0
        %1224 = vmatprep.subr.mxu0 0.0
        %1225 = vmatpush2.xpose.msra.mxu0 0.0
        %1226 = vmatprep.subr.mxu0 0.0
        %1227 = vmatpush2.xpose.msra.mxu0 0.0
        %1228 = vmatprep.subr.mxu0 0.0
        %1229 = vmatpush2.xpose.msra.mxu0 0.0
        %1230 = vmatprep.subr.mxu0 0.0
        %1231 = vmatpush2.xpose.msra.mxu0 0.0
        %1232 = vmatprep.subr.mxu0 0.0
        %1233 = vmatpush2.xpose.msra.mxu0 0.0
        %1234 = vmatprep.subr.mxu0 0.0
        %1235 = vmatpush2.xpose.msra.mxu0 0.0
        %1236 = vmatprep.subr.mxu0 0.0
        %1237 = vmatpush2.xpose.msra.mxu0 0.0
        %1238 = vmatprep.subr.mxu0 0.0
        %1239 = vmatpush2.xpose.msra.mxu0 0.0
        %1240 = vmatprep.subr.mxu0 0.0
        %1241 = vmatpush2.xpose.msra.mxu0 0.0
        %1242 = vmatprep.subr.mxu0 0.0
        %1243 = vmatpush2.xpose.msra.mxu0 0.0
        %1244 = vmatprep.subr.mxu0 0.0
        %1245 = vmatpush2.xpose.msra.mxu0 0.0
        %1246 = vmatprep.subr.mxu0 0.0
        %1247 = vmatpush2.xpose.msra.mxu0 0.0
        %1248 = vmatprep.mubr.f32.mxu0 0.0
        %1249 = vmatmul.mubr.f32.gmra.mxu0 %v1170
        %v1250 = vpop.f32.mrf.mxu0
        %v1251 = vadd.f32 0.0, %v1250
        %v1252 = vpop.f32.mrf.mxu0
        %1253 = vdwg.mxu0
        %v1255 = vsel %vm913, %v906, 0
        %v1258 = vsel %vm913, %v180, 0
        %v1261 = vsel %vm913, %v181, 0
        %v1264 = vsel %vm913, %v182, 0
        %v1267 = vsel %vm913, %v183, 0
        %1269 = vmatprep.subr.mxu0 0.0
        %1270 = vmatpush1.xpose.msra.mxu0 0.0
        %1271 = vmatprep.subr.mxu0 0.0
        %1272 = vmatpush1.xpose.msra.mxu0 0.0
        %1273 = vmatprep.subr.mxu0 0.0
        %1274 = vmatpush1.xpose.msra.mxu0 0.0
        %1275 = vmatprep.subr.mxu0 0.0
        %1276 = vmatpush1.xpose.msra.mxu0 0.0
        %1277 = vmatprep.subr.mxu0 0.0
        %1278 = vmatpush1.xpose.msra.mxu0 0.0
        %1279 = vmatprep.subr.mxu0 0.0
        %1280 = vmatpush1.xpose.msra.mxu0 0.0
        %1281 = vmatprep.subr.mxu0 0.0
        %1282 = vmatpush1.xpose.msra.mxu0 0.0
        %1283 = vmatprep.subr.mxu0 0.0
        %1284 = vmatpush1.xpose.msra.mxu0 0.0
        %1285 = vmatprep.subr.mxu0 0.0
        %1286 = vmatpush1.xpose.msra.mxu0 0.0
        %1287 = vmatprep.subr.mxu0 0.0
        %1288 = vmatpush1.xpose.msra.mxu0 0.0
        %1289 = vmatprep.subr.mxu0 0.0
        %1290 = vmatpush1.xpose.msra.mxu0 0.0
        %1291 = vmatprep.subr.mxu0 0.0
        %1292 = vmatpush1.xpose.msra.mxu0 0.0
        %1293 = vmatprep.subr.mxu0 0.0
        %1294 = vmatpush1.xpose.msra.mxu0 %v1267
        %1295 = vmatprep.subr.mxu0 0.0
        %1296 = vmatpush1.xpose.msra.mxu0 %v1264
        %1297 = vmatprep.subr.mxu0 0.0
        %1298 = vmatpush1.xpose.msra.mxu0 %v1261
        %1299 = vmatprep.subr.mxu0 0.0
        %1300 = vmatpush1.xpose.msra.mxu0 %v1258
        %1301 = vmatprep.subr.mxu0 0.0
        %1302 = vmatpush2.xpose.msra.mxu0 0.0
        %1303 = vmatprep.subr.mxu0 0.0
        %1304 = vmatpush2.xpose.msra.mxu0 0.0
        %1305 = vmatprep.subr.mxu0 0.0
        %1306 = vmatpush2.xpose.msra.mxu0 0.0
        %1307 = vmatprep.subr.mxu0 0.0
        %1308 = vmatpush2.xpose.msra.mxu0 0.0
        %1309 = vmatprep.subr.mxu0 0.0
        %1310 = vmatpush2.xpose.msra.mxu0 0.0
        %1311 = vmatprep.subr.mxu0 0.0
        %1312 = vmatpush2.xpose.msra.mxu0 0.0
        %1313 = vmatprep.subr.mxu0 0.0
        %1314 = vmatpush2.xpose.msra.mxu0 0.0
        %1315 = vmatprep.subr.mxu0 0.0
        %1316 = vmatpush2.xpose.msra.mxu0 0.0
        %1317 = vmatprep.subr.mxu0 0.0
        %1318 = vmatpush2.xpose.msra.mxu0 0.0
        %1319 = vmatprep.subr.mxu0 0.0
        %1320 = vmatpush2.xpose.msra.mxu0 0.0
        %1321 = vmatprep.subr.mxu0 0.0
        %1322 = vmatpush2.xpose.msra.mxu0 0.0
        %1323 = vmatprep.subr.mxu0 0.0
        %1324 = vmatpush2.xpose.msra.mxu0 0.0
        %1325 = vmatprep.subr.mxu0 0.0
        %1326 = vmatpush2.xpose.msra.mxu0 0.0
        %1327 = vmatprep.subr.mxu0 0.0
        %1328 = vmatpush2.xpose.msra.mxu0 0.0
        %1329 = vmatprep.subr.mxu0 0.0
        %1330 = vmatpush2.xpose.msra.mxu0 0.0
        %1331 = vmatprep.subr.mxu0 0.0
        %1332 = vmatpush2.xpose.msra.mxu0 0.0
        %1333 = vmatprep.mubr.f32.mxu0 0.0
        %1334 = vmatmul.mubr.f32.gmra.mxu0 %v1255
        %v1335 = vpop.f32.mrf.mxu0
        %v1336 = vadd.f32 0.0, %v1335
        %v1337 = vpop.f32.mrf.mxu0
        %1338 = vdwg.mxu0
        %v1340 = vsel %vm913, %v908, 0
        %v1343 = vsel %vm913, %v184, 0
        %v1346 = vsel %vm913, %v185, 0
        %v1349 = vsel %vm913, %v186, 0
        %v1352 = vsel %vm913, %v187, 0
        %1354 = vmatprep.subr.mxu0 0.0
        %1355 = vmatpush1.xpose.msra.mxu0 0.0
        %1356 = vmatprep.subr.mxu0 0.0
        %1357 = vmatpush1.xpose.msra.mxu0 0.0
        %1358 = vmatprep.subr.mxu0 0.0
        %1359 = vmatpush1.xpose.msra.mxu0 0.0
        %1360 = vmatprep.subr.mxu0 0.0
        %1361 = vmatpush1.xpose.msra.mxu0 0.0
        %1362 = vmatprep.subr.mxu0 0.0
        %1363 = vmatpush1.xpose.msra.mxu0 0.0
        %1364 = vmatprep.subr.mxu0 0.0
        %1365 = vmatpush1.xpose.msra.mxu0 0.0
        %1366 = vmatprep.subr.mxu0 0.0
        %1367 = vmatpush1.xpose.msra.mxu0 0.0
        %1368 = vmatprep.subr.mxu0 0.0
        %1369 = vmatpush1.xpose.msra.mxu0 0.0
        %1370 = vmatprep.subr.mxu0 0.0
        %1371 = vmatpush1.xpose.msra.mxu0 0.0
        %1372 = vmatprep.subr.mxu0 0.0
        %1373 = vmatpush1.xpose.msra.mxu0 0.0
        %1374 = vmatprep.subr.mxu0 0.0
        %1375 = vmatpush1.xpose.msra.mxu0 0.0
        %1376 = vmatprep.subr.mxu0 0.0
        %1377 = vmatpush1.xpose.msra.mxu0 0.0
        %1378 = vmatprep.subr.mxu0 0.0
        %1379 = vmatpush1.xpose.msra.mxu0 %v1352
        %1380 = vmatprep.subr.mxu0 0.0
        %1381 = vmatpush1.xpose.msra.mxu0 %v1349
        %1382 = vmatprep.subr.mxu0 0.0
        %1383 = vmatpush1.xpose.msra.mxu0 %v1346
        %1384 = vmatprep.subr.mxu0 0.0
        %1385 = vmatpush1.xpose.msra.mxu0 %v1343
        %1386 = vmatprep.subr.mxu0 0.0
        %1387 = vmatpush2.xpose.msra.mxu0 0.0
        %1388 = vmatprep.subr.mxu0 0.0
        %1389 = vmatpush2.xpose.msra.mxu0 0.0
        %1390 = vmatprep.subr.mxu0 0.0
        %1391 = vmatpush2.xpose.msra.mxu0 0.0
        %1392 = vmatprep.subr.mxu0 0.0
        %1393 = vmatpush2.xpose.msra.mxu0 0.0
        %1394 = vmatprep.subr.mxu0 0.0
        %1395 = vmatpush2.xpose.msra.mxu0 0.0
        %1396 = vmatprep.subr.mxu0 0.0
        %1397 = vmatpush2.xpose.msra.mxu0 0.0
        %1398 = vmatprep.subr.mxu0 0.0
        %1399 = vmatpush2.xpose.msra.mxu0 0.0
        %1400 = vmatprep.subr.mxu0 0.0
        %1401 = vmatpush2.xpose.msra.mxu0 0.0
        %1402 = vmatprep.subr.mxu0 0.0
        %1403 = vmatpush2.xpose.msra.mxu0 0.0
        %1404 = vmatprep.subr.mxu0 0.0
        %1405 = vmatpush2.xpose.msra.mxu0 0.0
        %1406 = vmatprep.subr.mxu0 0.0
        %1407 = vmatpush2.xpose.msra.mxu0 0.0
        %1408 = vmatprep.subr.mxu0 0.0
        %1409 = vmatpush2.xpose.msra.mxu0 0.0
        %1410 = vmatprep.subr.mxu0 0.0
        %1411 = vmatpush2.xpose.msra.mxu0 0.0
        %1412 = vmatprep.subr.mxu0 0.0
        %1413 = vmatpush2.xpose.msra.mxu0 0.0
        %1414 = vmatprep.subr.mxu0 0.0
        %1415 = vmatpush2.xpose.msra.mxu0 0.0
        %1416 = vmatprep.subr.mxu0 0.0
        %1417 = vmatpush2.xpose.msra.mxu0 0.0
        %1418 = vmatprep.mubr.f32.mxu0 0.0
        %1419 = vmatmul.mubr.f32.gmra.mxu0 %v1340
        %v1420 = vpop.f32.mrf.mxu0
        %v1421 = vadd.f32 0.0, %v1420
        %v1422 = vpop.f32.mrf.mxu0
        %1423 = vdwg.mxu0
        %v1425 = vsel %vm913, %v910, 0
        %v1428 = vsel %vm913, %v188, 0
        %v1431 = vsel %vm913, %v189, 0
        %v1434 = vsel %vm913, %v190, 0
        %v1437 = vsel %vm913, %v191, 0
        %1439 = vmatprep.subr.mxu0 0.0
        %1440 = vmatpush1.xpose.msra.mxu0 0.0
        %1441 = vmatprep.subr.mxu0 0.0
        %1442 = vmatpush1.xpose.msra.mxu0 0.0
        %1443 = vmatprep.subr.mxu0 0.0
        %1444 = vmatpush1.xpose.msra.mxu0 0.0
        %1445 = vmatprep.subr.mxu0 0.0
        %1446 = vmatpush1.xpose.msra.mxu0 0.0
        %1447 = vmatprep.subr.mxu0 0.0
        %1448 = vmatpush1.xpose.msra.mxu0 0.0
        %1449 = vmatprep.subr.mxu0 0.0
        %1450 = vmatpush1.xpose.msra.mxu0 0.0
        %1451 = vmatprep.subr.mxu0 0.0
        %1452 = vmatpush1.xpose.msra.mxu0 0.0
        %1453 = vmatprep.subr.mxu0 0.0
        %1454 = vmatpush1.xpose.msra.mxu0 0.0
        %1455 = vmatprep.subr.mxu0 0.0
        %1456 = vmatpush1.xpose.msra.mxu0 0.0
        %1457 = vmatprep.subr.mxu0 0.0
        %1458 = vmatpush1.xpose.msra.mxu0 0.0
        %1459 = vmatprep.subr.mxu0 0.0
        %1460 = vmatpush1.xpose.msra.mxu0 0.0
        %1461 = vmatprep.subr.mxu0 0.0
        %1462 = vmatpush1.xpose.msra.mxu0 0.0
        %1463 = vmatprep.subr.mxu0 0.0
        %1464 = vmatpush1.xpose.msra.mxu0 %v1437
        %1465 = vmatprep.subr.mxu0 0.0
        %1466 = vmatpush1.xpose.msra.mxu0 %v1434
        %1467 = vmatprep.subr.mxu0 0.0
        %1468 = vmatpush1.xpose.msra.mxu0 %v1431
        %1469 = vmatprep.subr.mxu0 0.0
        %1470 = vmatpush1.xpose.msra.mxu0 %v1428
        %1471 = vmatprep.subr.mxu0 0.0
        %1472 = vmatpush2.xpose.msra.mxu0 0.0
        %1473 = vmatprep.subr.mxu0 0.0
        %1474 = vmatpush2.xpose.msra.mxu0 0.0
        %1475 = vmatprep.subr.mxu0 0.0
        %1476 = vmatpush2.xpose.msra.mxu0 0.0
        %1477 = vmatprep.subr.mxu0 0.0
        %1478 = vmatpush2.xpose.msra.mxu0 0.0
        %1479 = vmatprep.subr.mxu0 0.0
        %1480 = vmatpush2.xpose.msra.mxu0 0.0
        %1481 = vmatprep.subr.mxu0 0.0
        %1482 = vmatpush2.xpose.msra.mxu0 0.0
        %1483 = vmatprep.subr.mxu0 0.0
        %1484 = vmatpush2.xpose.msra.mxu0 0.0
        %1485 = vmatprep.subr.mxu0 0.0
        %1486 = vmatpush2.xpose.msra.mxu0 0.0
        %1487 = vmatprep.subr.mxu0 0.0
        %1488 = vmatpush2.xpose.msra.mxu0 0.0
        %1489 = vmatprep.subr.mxu0 0.0
        %1490 = vmatpush2.xpose.msra.mxu0 0.0
        %1491 = vmatprep.subr.mxu0 0.0
        %1492 = vmatpush2.xpose.msra.mxu0 0.0
        %1493 = vmatprep.subr.mxu0 0.0
        %1494 = vmatpush2.xpose.msra.mxu0 0.0
        %1495 = vmatprep.subr.mxu0 0.0
        %1496 = vmatpush2.xpose.msra.mxu0 0.0
        %1497 = vmatprep.subr.mxu0 0.0
        %1498 = vmatpush2.xpose.msra.mxu0 0.0
        %1499 = vmatprep.subr.mxu0 0.0
        %1500 = vmatpush2.xpose.msra.mxu0 0.0
        %1501 = vmatprep.subr.mxu0 0.0
        %1502 = vmatpush2.xpose.msra.mxu0 0.0
        %1503 = vmatprep.mubr.f32.mxu0 0.0
        %1504 = vmatmul.mubr.f32.gmra.mxu0 %v1425
        %v1505 = vpop.f32.mrf.mxu0
        %v1506 = vadd.f32 0.0, %v1505
        %v1507 = vpop.f32.mrf.mxu0
        %1508 = vdwg.mxu0
        %v1510 = vsel %vm913, %v912, 0
        %v1513 = vsel %vm913, %v192, 0
        %v1516 = vsel %vm913, %v193, 0
        %v1519 = vsel %vm913, %v194, 0
        %v1522 = vsel %vm913, %v195, 0
        %1524 = vmatprep.subr.mxu0 0.0
        %1525 = vmatpush1.xpose.msra.mxu0 0.0
        %1526 = vmatprep.subr.mxu0 0.0
        %1527 = vmatpush1.xpose.msra.mxu0 0.0
        %1528 = vmatprep.subr.mxu0 0.0
        %1529 = vmatpush1.xpose.msra.mxu0 0.0
        %1530 = vmatprep.subr.mxu0 0.0
        %1531 = vmatpush1.xpose.msra.mxu0 0.0
        %1532 = vmatprep.subr.mxu0 0.0
        %1533 = vmatpush1.xpose.msra.mxu0 0.0
        %1534 = vmatprep.subr.mxu0 0.0
        %1535 = vmatpush1.xpose.msra.mxu0 0.0
        %1536 = vmatprep.subr.mxu0 0.0
        %1537 = vmatpush1.xpose.msra.mxu0 0.0
        %1538 = vmatprep.subr.mxu0 0.0
        %1539 = vmatpush1.xpose.msra.mxu0 0.0
        %1540 = vmatprep.subr.mxu0 0.0
        %1541 = vmatpush1.xpose.msra.mxu0 0.0
        %1542 = vmatprep.subr.mxu0 0.0
        %1543 = vmatpush1.xpose.msra.mxu0 0.0
        %1544 = vmatprep.subr.mxu0 0.0
        %1545 = vmatpush1.xpose.msra.mxu0 0.0
        %1546 = vmatprep.subr.mxu0 0.0
        %1547 = vmatpush1.xpose.msra.mxu0 0.0
        %1548 = vmatprep.subr.mxu0 0.0
        %1549 = vmatpush1.xpose.msra.mxu0 %v1522
        %1550 = vmatprep.subr.mxu0 0.0
        %1551 = vmatpush1.xpose.msra.mxu0 %v1519
        %1552 = vmatprep.subr.mxu0 0.0
        %1553 = vmatpush1.xpose.msra.mxu0 %v1516
        %1554 = vmatprep.subr.mxu0 0.0
        %1555 = vmatpush1.xpose.msra.mxu0 %v1513
        %1556 = vmatprep.subr.mxu0 0.0
        %1557 = vmatpush2.xpose.msra.mxu0 0.0
        %1558 = vmatprep.subr.mxu0 0.0
        %1559 = vmatpush2.xpose.msra.mxu0 0.0
        %1560 = vmatprep.subr.mxu0 0.0
        %1561 = vmatpush2.xpose.msra.mxu0 0.0
        %1562 = vmatprep.subr.mxu0 0.0
        %1563 = vmatpush2.xpose.msra.mxu0 0.0
        %1564 = vmatprep.subr.mxu0 0.0
        %1565 = vmatpush2.xpose.msra.mxu0 0.0
        %1566 = vmatprep.subr.mxu0 0.0
        %1567 = vmatpush2.xpose.msra.mxu0 0.0
        %1568 = vmatprep.subr.mxu0 0.0
        %1569 = vmatpush2.xpose.msra.mxu0 0.0
        %1570 = vmatprep.subr.mxu0 0.0
        %1571 = vmatpush2.xpose.msra.mxu0 0.0
        %1572 = vmatprep.subr.mxu0 0.0
        %1573 = vmatpush2.xpose.msra.mxu0 0.0
        %1574 = vmatprep.subr.mxu0 0.0
        %1575 = vmatpush2.xpose.msra.mxu0 0.0
        %1576 = vmatprep.subr.mxu0 0.0
        %1577 = vmatpush2.xpose.msra.mxu0 0.0
        %1578 = vmatprep.subr.mxu0 0.0
        %1579 = vmatpush2.xpose.msra.mxu0 0.0
        %1580 = vmatprep.subr.mxu0 0.0
        %1581 = vmatpush2.xpose.msra.mxu0 0.0
        %1582 = vmatprep.subr.mxu0 0.0
        %1583 = vmatpush2.xpose.msra.mxu0 0.0
        %1584 = vmatprep.subr.mxu0 0.0
        %1585 = vmatpush2.xpose.msra.mxu0 0.0
        %1586 = vmatprep.subr.mxu0 0.0
        %1587 = vmatpush2.xpose.msra.mxu0 0.0
        %1588 = vmatprep.mubr.f32.mxu0 0.0
        %1589 = vmatmul.mubr.f32.gmra.mxu0 %v1510
        %v1590 = vpop.f32.mrf.mxu0
        %v1591 = vadd.f32 0.0, %v1590
        %v1592 = vpop.f32.mrf.mxu0
        %1593 = vdwg.mxu0
        %v1602 = vrot.slane %v1081, 7
        %vm1603 = vcmask 1041409
        %v1604 = vsel %vm1603, %v1602, %v996
        %v1605 = vrot.slane %v1166, 6
        %vm1606 = vcmask 1042434
        %v1607 = vsel %vm1606, %v1605, %v1604
        %v1608 = vrot.slane %v1251, 5
        %vm1609 = vcmask 1043459
        %v1610 = vsel %vm1609, %v1608, %v1607
        %v1611 = vrot.slane %v1336, 4
        %vm1612 = vcmask 1044484
        %v1613 = vsel %vm1612, %v1611, %v1610
        %v1614 = vrot.slane %v1421, 3
        %vm1615 = vcmask 1045509
        %v1616 = vsel %vm1615, %v1614, %v1613
        %v1617 = vrot.slane %v1506, 2
        %vm1618 = vcmask 1046534
        %v1619 = vsel %vm1618, %v1617, %v1616
        %v1620 = vrot.slane %v1591, 1
        %vm1621 = vcmask 1047559
        %v1622 = vsel %vm1621, %v1620, %v1619
        %1624 = vst.msk [vmem:[%s152] sm:$0xff] %vm247, %v1622
        %s1625 = sand.u32 %s76, 1
        %s1626 = scalar_lea.sflag [#allocation3], %s1625
        %s1627 = sand.u32 %s76, 1
        %s1628 = smul.addr %s1627, 8
        %s1629 = scalar_lea.vmem [#allocation2], %s1628
        // Predicated region
        $region29: #{_lambda_.1} parent=27 // pred_check
          %p1630 = pneg %p86
        $region30: #{_lambda_.1} parent=27 // pred_check_branch
          %1632 = sbr.rel (%p1630) target = $region32
        $region31: #{_lambda_.1} parent=27 // pred_region
          %s1634 = ssub.s32 128, 128
          %1635 = vsyncadd %s1626, %s1634
          %s1636 = smul.addr %s16, 128
          %s1637 = scalar_lea.hbm %s2, %s1636
          %s1639 = sshll.u32 %s1629, 4
          %s1640 = int_to_ptr.vmem [resolvable:$true] %s1639
          %1642 = dma.vmem_to_hbm [thread:$0]  %s1640, 128, %s1637, %s1626
        $region32: #{_lambda_.1} parent=27 // pred_fallthru
          _
      $region28: #{_lambda_.1} parent=5 // pred_fallthru
        _
      %p1643 = scmp.le.s32.totalorder 2, %s11
      // Predicated region
      $region33: #{_lambda_.1} parent=5 // pred_check
        %p1644 = pneg %p1643
      $region34: #{_lambda_.1} parent=5 // pred_check_branch
        %1646 = sbr.rel (%p1644) target = $region36
      $region35: #{_lambda_.1} parent=5 // pred_region
        %s1647 = ssub.s32 %s11, 2
        // Predicated region
        $region37: #{_lambda_.1} parent=35 // pred_check
          %p1648 = pneg %p92
        $region38: #{_lambda_.1} parent=35 // pred_check_branch
          %1650 = sbr.rel (%p1648) target = $region40
        $region39: #{_lambda_.1} parent=35 // pred_region
          %s1651 = sand.u32 %s77, 1
          %s1652 = scalar_lea.sflag [#allocation3], %s1651
          %s1653 = sand.u32 %s77, 1
          %s1654 = smul.addr %s1653, 8
          %s1655 = scalar_lea.vmem [#allocation2], %s1654
          %1656 = dma.done %s1652, 128
        $region40: #{_lambda_.1} parent=35 // pred_fallthru
          _
      $region36: #{_lambda_.1} parent=5 // pred_fallthru
        _
    $region6: #{_lambda_.1} parent=1 // loop_footer
      %s15 = sadd.s32 1, %s11
    $region7: #{_lambda_.1} parent=1 // loop_footer_branch
      %10 = sbr.rel target = $region3
    $region8: #{_lambda_.1} parent=1 // loop_exit
      _
    %1657 = vsyncpa [#allocation3], 1
    %s1658 = scalar_lea.sflag [#allocation3], 1
    %1659 = vsyncpa %s1658, 1

</llo_original>
